<compile_context>
chip_gen: v7x
topology: tpu7x:2x2x1
jax: 0.10.0
libtpu: 0.0.40
codegen_flags: <defaults>
</compile_context>

<pallas_src>
import jax
import jax.numpy as jnp
from jax.experimental import pallas as pl
from jax.experimental.pallas import tpu as pltpu

ALPHA_SIM_CSE = 0.5   # sim_cse_config['alpha_sim_cse'] default
SIM_CSE_TEMP = 0.05   # present in config but unused by the reference forward
COS_EPS = 1e-8        # nn.CosineSimilarity default eps


# --------------------------------------------------------------------------- #
# Kernels
# --------------------------------------------------------------------------- #
def _pool_kernel(mask_ref, h1_ref, h2_ref, z1_ref, z2_ref):
    """Masked-sum pooling.  Grid: (batch blocks [parallel], L tiles [arbitrary]).

    The f32 outputs are the accumulators; their block index is constant along
    the L axis, so they stay resident in VMEM for the whole reduction sweep.
    """
    @pl.when(pl.program_id(1) == 0)
    def _init():
        z1_ref[...] = jnp.zeros_like(z1_ref)
        z2_ref[...] = jnp.zeros_like(z2_ref)

    mask3 = mask_ref[...]          # (TB, 1, TL), hidden dtype (0/1 mask -> exact)
    # Masked-sum pooling on the MXU: batched (1, TL) @ (TL, H), f32 accumulate
    # directly into the resident output blocks (no scratch, no reshapes).
    z1_ref[...] += jnp.einsum('bxl,blh->bxh', mask3, h1_ref[...],
                              preferred_element_type=jnp.float32)
    z2_ref[...] += jnp.einsum('bxl,blh->bxh', mask3, h2_ref[...],
                              preferred_element_type=jnp.float32)


def _epilogue_kernel(tok_ref, z1s_ref, z2s_ref, out_ref):
    """cos-sim matrix + CrossEntropy(labels=arange(B)) on pooled sums."""
    B = z1s_ref.shape[0]

    # Pooler('avg'): divide masked sums by token counts (no zero-token guard,
    # matching the reference).
    inv_tok = 1.0 / tok_ref[...]                                   # (B, 1)
    z1 = z1s_ref[...] * inv_tok                                    # (B, H) f32
    z2 = z2s_ref[...] * inv_tok

    n1 = jnp.sqrt(jnp.sum(z1 * z1, axis=-1, keepdims=True))        # (B, 1)
    n2 = jnp.sqrt(jnp.sum(z2 * z2, axis=-1, keepdims=True))        # (B, 1)
    # Contract the H dim of both operands directly (no explicit z2.T).
    dots = jax.lax.dot_general(z1, z2, (((1,), (1,)), ((), ())),
                               preferred_element_type=jnp.float32)  # (B, B)
    cos = dots / jnp.maximum(n1 * n2.T, COS_EPS)

    # CrossEntropy, reduction='mean'; diagonal term computed directly.
    diag = (jnp.sum(z1 * z2, axis=-1, keepdims=True)
            / jnp.maximum(n1 * n2, COS_EPS))                        # (B, 1)
    m = jnp.max(cos, axis=-1, keepdims=True)                        # (B, 1)
    lse = m + jnp.log(jnp.sum(jnp.exp(cos - m), axis=-1, keepdims=True))
    loss = jnp.sum(lse - diag, keepdims=True) / jnp.float32(B)      # (1, 1)
    out_ref[...] = ALPHA_SIM_CSE * loss


# --------------------------------------------------------------------------- #
# Tiling helpers (generation-aware)
# --------------------------------------------------------------------------- #
def _round_up(x, m):
    return ((x + m - 1) // m) * m


def _physical_vmem_bytes():
    """Per-TensorCore VMEM: 64 MiB on v7x, 128 MiB on v5e/v6e.  Fall back to the
    conservative 64 MiB if the query is unavailable."""
    try:
        return int(pltpu.get_tpu_info().vmem_capacity_bytes)
    except Exception:
        return 64 * 1024 * 1024


def _choose_tiles(B, L, H, itemsize, budget_bytes):
    """Pick (tile_b, tile_l).  tile_b is a multiple of 8 (output sublane tiling),
    tile_l a multiple of 128 (mask lane tiling).  Prefer >= 2 batch blocks when
    B >= 16 so the 'parallel' batch axis shards across v7x's two TensorCores;
    shrink tile_b if needed for very large B*H, then grow tile_l until the
    double-buffered pipeline blocks hit the budget."""
    b_pad8 = _round_up(B, 8)
    l_cap = _round_up(L, 128)

    def pipeline_bytes(tb, tl):
        # (2 hidden-state blocks + 1 mask block) x double buffering.
        return 2 * (2 * tb * tl * H * itemsize + tb * tl * itemsize)

    n_b = 2 if b_pad8 >= 16 else 1
    tile_b = _round_up(-(-b_pad8 // n_b), 8)
    while tile_b > 8 and pipeline_bytes(tile_b, 128) > budget_bytes:
        n_b *= 2
        tile_b = _round_up(-(-b_pad8 // n_b), 8)

    tile_l = 128
    while tile_l < l_cap and pipeline_bytes(tile_b, tile_l * 2) <= budget_bytes:
        tile_l *= 2
    tile_l = min(tile_l, l_cap)
    return tile_b, tile_l


# --------------------------------------------------------------------------- #
# Wrapper
# --------------------------------------------------------------------------- #
def simcse_loss(attention_mask, last_hidden_1, last_hidden_2, *,
                tile_b=None, tile_l=None, compute_dtype=None):
    """attention_mask: (B, L); last_hidden_*: (B, L, H) -> scalar f32 loss.

    compute_dtype: optionally cast the streamed hidden states (e.g. to
    jnp.bfloat16) to halve HBM traffic; introduces input rounding vs. the f32
    reference, so it is off by default.
    """
    B, L = attention_mask.shape
    Bh, Lh, H = last_hidden_1.shape
    assert (B, L) == (Bh, Lh) and last_hidden_2.shape == last_hidden_1.shape

    if compute_dtype is not None:
        last_hidden_1 = last_hidden_1.astype(compute_dtype)
        last_hidden_2 = last_hidden_2.astype(compute_dtype)
    dtype = last_hidden_1.dtype
    itemsize = jnp.dtype(dtype).itemsize

    # Generation-aware budgets: ~40 MiB pipeline buffers on 64-MiB parts (v7x),
    # ~64 MiB on 128-MiB parts (v5e/v6e); vmem_limit capped below physical.
    phys = _physical_vmem_bytes()
    budget = (40 << 20) if phys <= (64 << 20) else (64 << 20)
    auto_b, auto_l = _choose_tiles(B, L, H, itemsize, budget)
    if tile_b is None:
        tile_b = auto_b
    else:
        tile_b = _round_up(max(8, min(tile_b, _round_up(B, 8))), 8)
    if tile_l is None:
        tile_l = auto_l
    else:
        tile_l = _round_up(max(128, min(tile_l, _round_up(L, 128))), 128)

    # Token counts from the ORIGINAL (unpadded) mask, computed once on the host
    # side of the pipeline instead of being accumulated in the streaming loop.
    tok = jnp.sum(attention_mask.astype(jnp.float32), axis=-1, keepdims=True)  # (B, 1)

    # Zero-pad B and L to tile multiples: padded mask entries are 0, so they
    # contribute nothing to the pooled sums; padded batch rows are sliced off.
    b_pad = _round_up(B, tile_b)
    l_pad = _round_up(L, tile_l)
    if (b_pad, l_pad) != (B, L):
        attention_mask = jnp.pad(attention_mask, ((0, b_pad - B), (0, l_pad - L)))
        last_hidden_1 = jnp.pad(last_hidden_1, ((0, b_pad - B), (0, l_pad - L), (0, 0)))
        last_hidden_2 = jnp.pad(last_hidden_2, ((0, b_pad - B), (0, l_pad - L), (0, 0)))

    # Mask shaped (B, 1, L) so the pooling is a clean rank-3 batched matmul and
    # its block is (8,128)-aligned along (1 == full dim, tile_l).
    mask3 = attention_mask.astype(dtype)[:, None, :]

    n_b = b_pad // tile_b
    n_l = l_pad // tile_l

    # VMEM accounting matching the actual buffers (double-buffered inputs, the
    # resident f32 outputs, plus compiler headroom), capped below physical.
    h_block = tile_b * tile_l * H * itemsize
    m_block = tile_b * 8 * tile_l * itemsize      # (TB,1,TL): sublane 1 -> 8
    o_block = tile_b * 8 * H * 4                  # (TB,1,H) f32, sublane-padded
    needed = 2 * (2 * h_block + m_block) + 4 * o_block + (6 << 20)
    cap = min(int(phys * 0.85), phys - (8 << 20))
    vmem_limit = int(min(cap, max(needed, 16 << 20)))

    z1_sum, z2_sum = pl.pallas_call(
        _pool_kernel,
        grid=(n_b, n_l),
        in_specs=[
            pl.BlockSpec((tile_b, 1, tile_l), lambda b, l: (b, 0, l)),
            pl.BlockSpec((tile_b, tile_l, H), lambda b, l: (b, l, 0)),
            pl.BlockSpec((tile_b, tile_l, H), lambda b, l: (b, l, 0)),
        ],
        out_specs=(
            pl.BlockSpec((tile_b, 1, H), lambda b, l: (b, 0, 0)),
            pl.BlockSpec((tile_b, 1, H), lambda b, l: (b, 0, 0)),
        ),
        out_shape=(
            jax.ShapeDtypeStruct((b_pad, 1, H), jnp.float32),
            jax.ShapeDtypeStruct((b_pad, 1, H), jnp.float32),
        ),
        compiler_params=pltpu.CompilerParams(
            dimension_semantics=("parallel", "arbitrary"),  # batch || , L = reduction
            vmem_limit_bytes=vmem_limit,
        ),
    )(mask3, last_hidden_1, last_hidden_2)

    # Drop batch padding and the unit sublane dim outside the kernel (free
    # metadata ops on HBM arrays) so the epilogue sees dense (B, H) inputs.
    z1_sum = z1_sum[:B, 0, :]
    z2_sum = z2_sum[:B, 0, :]

    out = pl.pallas_call(
        _epilogue_kernel,
        out_shape=jax.ShapeDtypeStruct((1, 1), jnp.float32),
    )(tok, z1_sum, z2_sum)
    return out[0, 0]


# --------------------------------------------------------------------------- #
# Reference + test
# --------------------------------------------------------------------------- #
def _simcse_reference(attention_mask, h1, h2):
    mask = attention_mask.astype(jnp.float32)
    tok = jnp.sum(mask, axis=-1, keepdims=True)
    z1 = jnp.sum(h1.astype(jnp.float32) * mask[:, :, None], axis=1) / tok
    z2 = jnp.sum(h2.astype(jnp.float32) * mask[:, :, None], axis=1) / tok
    n1 = jnp.linalg.norm(z1, axis=-1, keepdims=True)
    n2 = jnp.linalg.norm(z2, axis=-1, keepdims=True)
    cos = (z1 @ z2.T) / jnp.maximum(n1 * n2.T, COS_EPS)
    logz = jax.scipy.special.logsumexp(cos, axis=-1)
    diag = jnp.diagonal(cos)
    return ALPHA_SIM_CSE * jnp.mean(logz - diag)


if __name__ == "__main__":
    key = jax.random.PRNGKey(0)
    B, L, H = 8, 256, 128

    k1, k2, k3 = jax.random.split(key, 3)
    last_hidden_1 = jax.random.normal(k1, (B, L, H), dtype=jnp.float32)
    last_hidden_2 = jax.random.normal(k2, (B, L, H), dtype=jnp.float32)
    # attention_mask: 1s followed by trailing padding, like a real batch.
    lengths = jax.random.randint(k3, (B,), minval=L // 4, maxval=L + 1)
    attention_mask = (jnp.arange(L)[None, :] < lengths[:, None]).astype(jnp.float32)

    # Case 1: force tile_l=128 -> 2 pipelined reduction steps over L
    # (exercises init / accumulate phases of the resident-output accumulator).
    loss = jax.block_until_ready(
        simcse_loss(attention_mask, last_hidden_1, last_hidden_2, tile_l=128))
    ref = _simcse_reference(attention_mask, last_hidden_1, last_hidden_2)
    assert jnp.allclose(loss, ref, atol=1e-5, rtol=1e-4), (loss, ref)

    # Case 2: ragged L (not a multiple of the tile) with auto tile selection,
    # exercising the L zero-padding path.
    L2 = 200
    h1b = last_hidden_1[:, :L2]
    h2b = last_hidden_2[:, :L2]
    maskb = (jnp.arange(L2)[None, :]
             < jnp.minimum(lengths, L2)[:, None]).astype(jnp.float32)
    loss2 = jax.block_until_ready(simcse_loss(maskb, h1b, h2b))
    ref2 = _simcse_reference(maskb, h1b, h2b)
    assert jnp.allclose(loss2, ref2, atol=1e-5, rtol=1e-4), (loss2, ref2)

    # Case 3: B=24 -> two parallel batch blocks (tile_b=16) + batch padding
    # (exercises the megacore 'parallel' axis and the batch zero-padding path).
    B3 = 24
    kk1, kk2, kk3 = jax.random.split(jax.random.PRNGKey(1), 3)
    h1c = jax.random.normal(kk1, (B3, L, H), dtype=jnp.float32)
    h2c = jax.random.normal(kk2, (B3, L, H), dtype=jnp.float32)
    len3 = jax.random.randint(kk3, (B3,), minval=L // 4, maxval=L + 1)
    maskc = (jnp.arange(L)[None, :] < len3[:, None]).astype(jnp.float32)
    loss3 = jax.block_until_ready(simcse_loss(maskc, h1c, h2c))
    ref3 = _simcse_reference(maskc, h1c, h2c)
    assert jnp.allclose(loss3, ref3, atol=1e-5, rtol=1e-4), (loss3, ref3)

    print("KERNEL_OK")
</pallas_src>

<mosaic_0001>
module attributes {stable_mosaic.version = 11 : i64} {
  func.func @_pool_kernel(%arg0: i32, %arg1: i32, %arg2: memref<8x1x128xf32, #tpu.memory_space<vmem>>, %arg3: memref<8x128x128xf32, #tpu.memory_space<vmem>>, %arg4: memref<8x128x128xf32, #tpu.memory_space<vmem>>, %arg5: memref<8x1x128xf32, #tpu.memory_space<vmem>>, %arg6: memref<8x1x128xf32, #tpu.memory_space<vmem>>) attributes {dimension_semantics = [#tpu.dimension_semantics<parallel>, #tpu.dimension_semantics<arbitrary>], iteration_bounds = array<i64: 1, 2>, scalar_prefetch = 0 : i64, scratch_operands = 0 : i64, tpu.core_type = #tpu.core_type<tc>, window_params = [{transform_indices = @transform_0, window_bounds = array<i64: 8, 1, 128>}, {transform_indices = @transform_1, window_bounds = array<i64: 8, 128, 128>}, {transform_indices = @transform_2, window_bounds = array<i64: 8, 128, 128>}, {transform_indices = @transform_3, window_bounds = array<i64: 8, 1, 128>}, {transform_indices = @transform_4, window_bounds = array<i64: 8, 1, 128>}]} {
    %c0_i32 = arith.constant 0 : i32
    %0 = arith.cmpi eq, %arg1, %c0_i32 : i32
    %1 = arith.extui %0 : i1 to i32
    %c0_i32_0 = arith.constant 0 : i32
    %2 = arith.cmpi ne, %1, %c0_i32_0 : i32
    scf.if %2 {
      %cst_22 = arith.constant 0.000000e+00 : f32
      %14 = vector.broadcast %cst_22 : f32 to vector<8x1x128xf32>
      %c0_23 = arith.constant 0 : index
      %c0_24 = arith.constant 0 : index
      %c0_25 = arith.constant 0 : index
      %15 = vector.load %arg5[%c0_23, %c0_24, %c0_25] : memref<8x1x128xf32, #tpu.memory_space<vmem>>, vector<8x1x128xf32>
      tpu.vector_store %arg5[%c0_23, %c0_24, %c0_25], %14 {strides = array<i32>} : memref<8x1x128xf32, #tpu.memory_space<vmem>>, vector<8x1x128xf32>,
      %cst_26 = arith.constant 0.000000e+00 : f32
      %16 = vector.broadcast %cst_26 : f32 to vector<8x1x128xf32>
      %c0_27 = arith.constant 0 : index
      %c0_28 = arith.constant 0 : index
      %c0_29 = arith.constant 0 : index
      %17 = vector.load %arg6[%c0_27, %c0_28, %c0_29] : memref<8x1x128xf32, #tpu.memory_space<vmem>>, vector<8x1x128xf32>
      tpu.vector_store %arg6[%c0_27, %c0_28, %c0_29], %16 {strides = array<i32>} : memref<8x1x128xf32, #tpu.memory_space<vmem>>, vector<8x1x128xf32>,
    } else {
    }
    %c0 = arith.constant 0 : index
    %c0_1 = arith.constant 0 : index
    %c0_2 = arith.constant 0 : index
    %3 = vector.load %arg2[%c0, %c0_1, %c0_2] : memref<8x1x128xf32, #tpu.memory_space<vmem>>, vector<8x1x128xf32>
    %c0_3 = arith.constant 0 : index
    %c0_4 = arith.constant 0 : index
    %c0_5 = arith.constant 0 : index
    %4 = vector.load %arg5[%c0_3, %c0_4, %c0_5] : memref<8x1x128xf32, #tpu.memory_space<vmem>>, vector<8x1x128xf32>
    %c0_6 = arith.constant 0 : index
    %c0_7 = arith.constant 0 : index
    %c0_8 = arith.constant 0 : index
    %5 = vector.load %arg3[%c0_6, %c0_7, %c0_8] : memref<8x128x128xf32, #tpu.memory_space<vmem>>, vector<8x128x128xf32>
    "tpu.trace_start"() <{level = 10 : i32, message = "bxl,blh->bxh"}> : () -> ()
    %cst = arith.constant dense<0.000000e+00> : vector<8x1x128xf32>
    %6 = tpu.matmul %3, %5, %cst {dimension_numbers = #tpu.dot_dimension_numbers<[2], [1], [1], [2], [0, 0, 0, 1, 1, 2], [0], [0]>} : vector<8x1x128xf32>, vector<8x128x128xf32>, vector<8x1x128xf32> -> vector<8x1x128xf32>
    "tpu.trace_stop"() : () -> ()
    %7 = arith.addf %4, %6 : vector<8x1x128xf32>
    %c0_9 = arith.constant 0 : index
    %c0_10 = arith.constant 0 : index
    %c0_11 = arith.constant 0 : index
    %8 = vector.load %arg5[%c0_9, %c0_10, %c0_11] : memref<8x1x128xf32, #tpu.memory_space<vmem>>, vector<8x1x128xf32>
    tpu.vector_store %arg5[%c0_9, %c0_10, %c0_11], %7 {strides = array<i32>} : memref<8x1x128xf32, #tpu.memory_space<vmem>>, vector<8x1x128xf32>,
    %c0_12 = arith.constant 0 : index
    %c0_13 = arith.constant 0 : index
    %c0_14 = arith.constant 0 : index
    %9 = vector.load %arg6[%c0_12, %c0_13, %c0_14] : memref<8x1x128xf32, #tpu.memory_space<vmem>>, vector<8x1x128xf32>
    %c0_15 = arith.constant 0 : index
    %c0_16 = arith.constant 0 : index
    %c0_17 = arith.constant 0 : index
    %10 = vector.load %arg4[%c0_15, %c0_16, %c0_17] : memref<8x128x128xf32, #tpu.memory_space<vmem>>, vector<8x128x128xf32>
    "tpu.trace_start"() <{level = 10 : i32, message = "bxl,blh->bxh"}> : () -> ()
    %cst_18 = arith.constant dense<0.000000e+00> : vector<8x1x128xf32>
    %11 = tpu.matmul %3, %10, %cst_18 {dimension_numbers = #tpu.dot_dimension_numbers<[2], [1], [1], [2], [0, 0, 0, 1, 1, 2], [0], [0]>} : vector<8x1x128xf32>, vector<8x128x128xf32>, vector<8x1x128xf32> -> vector<8x1x128xf32>
    "tpu.trace_stop"() : () -> ()
    %12 = arith.addf %9, %11 : vector<8x1x128xf32>
    %c0_19 = arith.constant 0 : index
    %c0_20 = arith.constant 0 : index
    %c0_21 = arith.constant 0 : index
    %13 = vector.load %arg6[%c0_19, %c0_20, %c0_21] : memref<8x1x128xf32, #tpu.memory_space<vmem>>, vector<8x1x128xf32>
    tpu.vector_store %arg6[%c0_19, %c0_20, %c0_21], %12 {strides = array<i32>} : memref<8x1x128xf32, #tpu.memory_space<vmem>>, vector<8x1x128xf32>,
    return
  }
  func.func @transform_0(%arg0: i32, %arg1: i32) -> (i32, i32, i32) {
    %c0_i32 = arith.constant 0 : i32
    %c0_i32_0 = arith.constant 0 : i32
    return %arg0, %c0_i32, %arg1 : i32, i32, i32
  }
  func.func @transform_1(%arg0: i32, %arg1: i32) -> (i32, i32, i32) {
    %c0_i32 = arith.constant 0 : i32
    %c0_i32_0 = arith.constant 0 : i32
    return %arg0, %arg1, %c0_i32 : i32, i32, i32
  }
  func.func @transform_2(%arg0: i32, %arg1: i32) -> (i32, i32, i32) {
    %c0_i32 = arith.constant 0 : i32
    %c0_i32_0 = arith.constant 0 : i32
    return %arg0, %arg1, %c0_i32 : i32, i32, i32
  }
  func.func @transform_3(%arg0: i32, %arg1: i32) -> (i32, i32, i32) {
    %c0_i32 = arith.constant 0 : i32
    %c0_i32_0 = arith.constant 0 : i32
    %c0_i32_1 = arith.constant 0 : i32
    return %arg0, %c0_i32, %c0_i32_0 : i32, i32, i32
  }
  func.func @transform_4(%arg0: i32, %arg1: i32) -> (i32, i32, i32) {
    %c0_i32 = arith.constant 0 : i32
    %c0_i32_0 = arith.constant 0 : i32
    %c0_i32_1 = arith.constant 0 : i32
    return %arg0, %c0_i32, %c0_i32_0 : i32, i32, i32
  }
}

</mosaic_0001>

<llo_original>
// kernel: tpu_custom_call.1
$region0: #{tpu_custom_call.1}
  #allocation0 [shape = 'u32[]', space=smem, size = 0x4, offset = 0x4, fixed_abs, tag = 'smem constant byte address 0x4 - core index']
  #allocation1 [shape = 'u32[144,128]{1,0:T(1,128)}', space=vmem, size = 0x12000, scoped, tag = 'internal scratch']
  #allocation11 [shape = 's32[]', space=sflag, size = 0x4, offset = 0, fixed_abs, tag = 'sflag constant byte address 0x0 - dummy sync flag']
  #allocation13 [shape = 's32[]', space=sflag, size = 0x4, offset = 0, fixed_abs, tag = 'sflag constant byte address 0x0 - dummy sync flag']
  %s0 = inlined_call_operand.hbm [shape: f32[8,1,256], index: 0, kind: input, shape index: {}]
  %s1 = inlined_call_operand.hbm [shape: f32[8,256,128], index: 1, kind: input, shape index: {}]
  %s2 = inlined_call_operand.hbm [shape: f32[8,256,128], index: 2, kind: input, shape index: {}]
  %s3 = inlined_call_operand.hbm [shape: f32[8,1,128], index: 3, kind: output, shape index: {0}]
  %s4 = inlined_call_operand.hbm [shape: f32[8,1,128], index: 4, kind: output, shape index: {1}]
  %5 = xla_tuple %s3, %s4
  %s6 = sld [smem:[#allocation0]]
  $region69: #{tpu_custom_call.1} parent=0
    _
  %s8 = ssub.s32 1, %s6
  %s9 = scalar_select 0, %s8, %s6
  $region1: #{tpu_custom_call.1} parent=0
    #allocation2 [shape = 'u8[8192]{0}', space=vmem, size = 0x2000, scoped, tag = 'input window, operand 0']
    #allocation3 [shape = 's32[2]{0}', space=sflag, size = 0x8, scoped, tag = 'scoped memory for tpu_custom_call.1']
    #allocation4 [shape = 's32[2]{0}', space=sflag, size = 0x8, scoped, tag = 'scoped memory for tpu_custom_call.1']
    #allocation5 [shape = 'u8[1048576]{0}', space=vmem, size = 0x100000, scoped, tag = 'input window, operand 1']
    #allocation6 [shape = 's32[2]{0}', space=sflag, size = 0x8, scoped, tag = 'scoped memory for tpu_custom_call.1']
    #allocation7 [shape = 'u8[1048576]{0}', space=vmem, size = 0x100000, scoped, tag = 'input window, operand 2']
    #allocation8 [shape = 'u8[4096]{0}', space=vmem, size = 0x1000, scoped, tag = 'output window, operand 0, single buffered']
    #allocation9 [shape = 'u8[4096]{0}', space=vmem, size = 0x1000, scoped, tag = 'output window, operand 1, single buffered']
    #allocation10 [shape = 's32[1]{0}', space=sflag, size = 0x4, scoped, tag = 'scoped memory for tpu_custom_call.1']
    %10 = vsyncpa [#allocation3], 0
    %s11 = scalar_lea.sflag [#allocation3], 1
    %12 = vsyncpa %s11, 0
    %13 = vsyncpa [#allocation6], 0
    %s14 = scalar_lea.sflag [#allocation6], 1
    %15 = vsyncpa %s14, 0
    %16 = vsyncpa [#allocation4], 0
    %17 = vsyncpa [#allocation10], 0
    loop: start=0, step=1, limit=4
    $region2: #{tpu_custom_call.1} parent=1 // loop_pre_header
      _
    $region3: #{tpu_custom_call.1} parent=1 // loop_header
      %s19 = sphi 0, %s23
      %p20 = scmp.ge.s32.totalorder %s19, 4
      %s26 = sphi 0, %s38
      %s27 = sphi 0, %s34
      %s28 = sphi 0, %s26
      %s29 = sphi 0, %s27
      %s30 = sphi 0, %s28
      %s31 = sphi 0, %s29
      %s43 = sphi 0, %s45
      %s46 = sphi 0, %s43
      %s47 = sphi 0, %s46
      %s63 = sphi 0, %s47
      %s71 = sphi 0, %s73
      %s74 = sphi 0, %s71
      %s75 = sphi 0, %s74
      %s91 = sphi 0, %s75
      %s99 = sphi 0, %s101
      %s102 = sphi 0, %s99
      %s103 = sphi 0, %s102
      %s119 = sphi 0, %s103
      %s125 = sphi 0, %s127
      %s128 = sphi 0, %s125
      %s129 = sphi 0, %s128
      %s145 = sphi 0, %s129
      %s151 = sphi 0, %s153
      %s154 = sphi 0, %s151
      %s155 = sphi 0, %s154
      %s171 = sphi 0, %s155
    $region4: #{tpu_custom_call.1} parent=1 // loop_header_branch
      %22 = sbr.rel (%p20) target = $region8
    $region5: #{tpu_custom_call.1} parent=1 // loop_body
      %s24 = ssub.s32 %s19, 1
      %s25 = ssub.s32 %s19, 2
      %s32 = sadd.s32 1, %s27
      %p33 = scmp.ge.s32.totalorder %s32, 2
      %s34 = scalar_select %p33, 0, %s32
      %s35 = sadd.s32 1, %s26
      %s36 = scalar_select %p33, %s35, %s26
      %p37 = scmp.ge.s32.totalorder %s36, 1
      %s38 = scalar_select %p37, 0, %s36
      %s39 = ssub.s32 %s26, %s38
      %s40 = ssub.s32 %s27, %s34
      %s41 = sor.u32 %s39, %s40
      %p42 = scmp.eq.s32.totalorder %s41, 0
      %s44 = sadd.s32 %s43, 1
      %s45 = scalar_select %p42, %s43, %s44
      %p48 = pneg %p42
      %p49 = scmp.eq.s32.totalorder %s19, 1
      %p50 = por %p48, %p49
      %p51 = scmp.ne.s32.totalorder %s43, %s46
      %p52 = scmp.eq.s32.totalorder %s19, 0
      %p53 = por %p51, %p52
      %p54 = scmp.ne.s32.totalorder %s43, %s46
      %p55 = scmp.eq.s32.totalorder %s24, 1
      %p56 = por %p54, %p55
      %p57 = scmp.ne.s32.totalorder %s46, %s47
      %p58 = scmp.eq.s32.totalorder %s24, 0
      %p59 = por %p57, %p58
      %p60 = scmp.ne.s32.totalorder %s46, %s47
      %p61 = scmp.eq.s32.totalorder %s25, 1
      %p62 = por %p60, %p61
      %p64 = scmp.ne.s32.totalorder %s47, %s63
      %p65 = scmp.eq.s32.totalorder %s25, 0
      %p66 = por %p64, %p65
      %s67 = ssub.s32 %s26, %s38
      %s68 = ssub.s32 %s27, %s34
      %s69 = sor.u32 %s67, %s68
      %p70 = scmp.eq.s32.totalorder %s69, 0
      %s72 = sadd.s32 %s71, 1
      %s73 = scalar_select %p70, %s71, %s72
      %p76 = pneg %p70
      %p77 = scmp.eq.s32.totalorder %s19, 1
      %p78 = por %p76, %p77
      %p79 = scmp.ne.s32.totalorder %s71, %s74
      %p80 = scmp.eq.s32.totalorder %s19, 0
      %p81 = por %p79, %p80
      %p82 = scmp.ne.s32.totalorder %s71, %s74
      %p83 = scmp.eq.s32.totalorder %s24, 1
      %p84 = por %p82, %p83
      %p85 = scmp.ne.s32.totalorder %s74, %s75
      %p86 = scmp.eq.s32.totalorder %s24, 0
      %p87 = por %p85, %p86
      %p88 = scmp.ne.s32.totalorder %s74, %s75
      %p89 = scmp.eq.s32.totalorder %s25, 1
      %p90 = por %p88, %p89
      %p92 = scmp.ne.s32.totalorder %s75, %s91
      %p93 = scmp.eq.s32.totalorder %s25, 0
      %p94 = por %p92, %p93
      %s95 = ssub.s32 %s26, %s38
      %s96 = ssub.s32 %s27, %s34
      %s97 = sor.u32 %s95, %s96
      %p98 = scmp.eq.s32.totalorder %s97, 0
      %s100 = sadd.s32 %s99, 1
      %s101 = scalar_select %p98, %s99, %s100
      %p104 = pneg %p98
      %p105 = scmp.eq.s32.totalorder %s19, 1
      %p106 = por %p104, %p105
      %p107 = scmp.ne.s32.totalorder %s99, %s102
      %p108 = scmp.eq.s32.totalorder %s19, 0
      %p109 = por %p107, %p108
      %p110 = scmp.ne.s32.totalorder %s99, %s102
      %p111 = scmp.eq.s32.totalorder %s24, 1
      %p112 = por %p110, %p111
      %p113 = scmp.ne.s32.totalorder %s102, %s103
      %p114 = scmp.eq.s32.totalorder %s24, 0
      %p115 = por %p113, %p114
      %p116 = scmp.ne.s32.totalorder %s102, %s103
      %p117 = scmp.eq.s32.totalorder %s25, 1
      %p118 = por %p116, %p117
      %p120 = scmp.ne.s32.totalorder %s103, %s119
      %p121 = scmp.eq.s32.totalorder %s25, 0
      %p122 = por %p120, %p121
      %s123 = ssub.s32 %s26, %s38
      %p124 = scmp.eq.s32.totalorder %s123, 0
      %s126 = sadd.s32 %s125, 1
      %s127 = scalar_select %p124, %s125, %s126
      %p130 = pneg %p124
      %p131 = scmp.eq.s32.totalorder %s19, 1
      %p132 = por %p130, %p131
      %p133 = scmp.ne.s32.totalorder %s125, %s128
      %p134 = scmp.eq.s32.totalorder %s19, 0
      %p135 = por %p133, %p134
      %p136 = scmp.ne.s32.totalorder %s125, %s128
      %p137 = scmp.eq.s32.totalorder %s24, 1
      %p138 = por %p136, %p137
      %p139 = scmp.ne.s32.totalorder %s128, %s129
      %p140 = scmp.eq.s32.totalorder %s24, 0
      %p141 = por %p139, %p140
      %p142 = scmp.ne.s32.totalorder %s128, %s129
      %p143 = scmp.eq.s32.totalorder %s25, 1
      %p144 = por %p142, %p143
      %p146 = scmp.ne.s32.totalorder %s129, %s145
      %p147 = scmp.eq.s32.totalorder %s25, 0
      %p148 = por %p146, %p147
      %s149 = ssub.s32 %s26, %s38
      %p150 = scmp.eq.s32.totalorder %s149, 0
      %s152 = sadd.s32 %s151, 1
      %s153 = scalar_select %p150, %s151, %s152
      %p156 = pneg %p150
      %p157 = scmp.eq.s32.totalorder %s19, 1
      %p158 = por %p156, %p157
      %p159 = scmp.ne.s32.totalorder %s151, %s154
      %p160 = scmp.eq.s32.totalorder %s19, 0
      %p161 = por %p159, %p160
      %p162 = scmp.ne.s32.totalorder %s151, %s154
      %p163 = scmp.eq.s32.totalorder %s24, 1
      %p164 = por %p162, %p163
      %p165 = scmp.ne.s32.totalorder %s154, %s155
      %p166 = scmp.eq.s32.totalorder %s24, 0
      %p167 = por %p165, %p166
      %p168 = scmp.ne.s32.totalorder %s154, %s155
      %p169 = scmp.eq.s32.totalorder %s25, 1
      %p170 = por %p168, %p169
      %p172 = scmp.ne.s32.totalorder %s155, %s171
      %p173 = scmp.eq.s32.totalorder %s25, 0
      %p174 = por %p172, %p173
      %p175 = scmp.le.s32.totalorder 1, %s19
      %p176 = scmp.lt.s32.totalorder %s19, 3
      %p177 = pnand %p175, %p176
      %p178 = pneg %p177
      // Predicated region
      $region9: #{tpu_custom_call.1} parent=5 // pred_check
        _
      $region10: #{tpu_custom_call.1} parent=5 // pred_check_branch
        %180 = sbr.rel (%p177) target = $region12
      $region11: #{tpu_custom_call.1} parent=5 // pred_region
        %s181 = ssub.s32 %s19, 1
      $region12: #{tpu_custom_call.1} parent=5 // pred_fallthru
        _
      %p182 = scmp.lt.s32.totalorder %s19, 2
      // Predicated region
      $region13: #{tpu_custom_call.1} parent=5 // pred_check
        %p183 = pneg %p182
      $region14: #{tpu_custom_call.1} parent=5 // pred_check_branch
        %185 = sbr.rel (%p183) target = $region16
      $region15: #{tpu_custom_call.1} parent=5 // pred_region
        // Predicated region
        $region17: #{tpu_custom_call.1} parent=15 // pred_check
          %p186 = pneg %p53
        $region18: #{tpu_custom_call.1} parent=15 // pred_check_branch
          %188 = sbr.rel (%p186) target = $region20
        $region19: #{tpu_custom_call.1} parent=15 // pred_region
          %s189 = sand.u32 %s43, 1
          %s190 = scalar_lea.sflag [#allocation3], %s189
          %s191 = sand.u32 %s43, 1
          %s192 = smul.addr %s191, 8
          %s193 = scalar_lea.vmem [#allocation2], %s192
          %s194 = smul.u32 8, %s26
          %s196 = ssub.s32 128, 128
          %197 = vsyncadd %s190, %s196
          %s198 = smul.addr %s194, 2
          %s199 = sadd.s32 %s27, %s198
          %s200 = smul.addr %s199, 16
          %s201 = scalar_lea.hbm %s0, %s200
          %s202 = sshll.u32 %s193, 4
          %s203 = int_to_ptr.vmem [resolvable:$true] %s202
          %208 = dma.hbm_to_vmem [thread:$0]  %s201, 128, %s203, %s190, 32, 16, 1
        $region20: #{tpu_custom_call.1} parent=15 // pred_fallthru
          _
        // Predicated region
        $region21: #{tpu_custom_call.1} parent=15 // pred_check
          %p209 = pneg %p81
        $region22: #{tpu_custom_call.1} parent=15 // pred_check_branch
          %211 = sbr.rel (%p209) target = $region24
        $region23: #{tpu_custom_call.1} parent=15 // pred_region
          #allocation12 [shape = 'u32[6]{0}', space=smem, size = 0x18, scoped, tag = 'DMA stride descriptor']
          %s212 = sand.u32 %s19, 1
          %s213 = scalar_lea.sflag [#allocation6], %s212
          %s214 = sand.u32 %s71, 1
          %s215 = smul.addr %s214, 1024
          %s216 = scalar_lea.vmem [#allocation5], %s215
          %s217 = smul.u32 8, %s26
          %s218 = smul.u32 16, %s27
          %s220 = ssub.s32 16384, 16384
          %221 = vsyncadd %s213, %s220
          %s222 = smul.addr %s217, 32
          %s223 = sadd.s32 %s218, %s222
          %s224 = smul.addr %s223, 128
          %s225 = scalar_lea.hbm %s1, %s224
          %s227 = sshll.u32 1, 14
          %s228 = sxor.u32 4294967295, %s227
          %s230 = sld [smem:[#allocation0]]
          %s231 = sadd.s32 2, %s230
          %s233 = sshll.u32 7, 26
          %s234 = sxor.u32 4294967295, %s233
          %s235 = sand.u32 0, %s234
          %s236 = sshll.u32 %s231, 26
          %s237 = sor.u32 %s235, %s236
          %s238 = sshll.u32 %s216, 4
          %s239 = int_to_ptr.vmem [resolvable:$true] %s238
          %245 = sst [smem:[#allocation12]] 4096
          %s246 = scalar_lea.smem [#allocation12], 1
          %247 = sst [smem:[%s246]] 2048
          %s248 = scalar_lea.smem [#allocation12], 2
          %249 = sst [smem:[%s248]] 16
          %s250 = scalar_lea.smem [#allocation12], 3
          %251 = sst [smem:[%s250]] 128
          %s252 = scalar_lea.smem [#allocation12], 4
          %253 = sst [smem:[%s252]] 128
          %s254 = scalar_lea.smem [#allocation12], 5
          %255 = sst [smem:[%s254]] 8
          %257 = dma.general %s225, 16384, %s239, %s213, [#allocation11], [#allocation12], %s237, 0
        $region24: #{tpu_custom_call.1} parent=15 // pred_fallthru
          _
        // Predicated region
        $region25: #{tpu_custom_call.1} parent=15 // pred_check
          %p258 = pneg %p109
        $region26: #{tpu_custom_call.1} parent=15 // pred_check_branch
          %260 = sbr.rel (%p258) target = $region28
        $region27: #{tpu_custom_call.1} parent=15 // pred_region
          #allocation14 [shape = 'u32[6]{0}', space=smem, size = 0x18, scoped, tag = 'DMA stride descriptor']
          %s261 = sand.u32 %s19, 1
          %s262 = scalar_lea.sflag [#allocation6], %s261
          %s263 = sand.u32 %s99, 1
          %s264 = smul.addr %s263, 1024
          %s265 = scalar_lea.vmem [#allocation7], %s264
          %s266 = smul.u32 8, %s26
          %s267 = smul.u32 16, %s27
          %s269 = ssub.s32 16384, 16384
          %270 = vsyncadd %s262, %s269
          %s271 = smul.addr %s266, 32
          %s272 = sadd.s32 %s267, %s271
          %s273 = smul.addr %s272, 128
          %s274 = scalar_lea.hbm %s2, %s273
          %s276 = sshll.u32 1, 14
          %s277 = sxor.u32 4294967295, %s276
          %s279 = sld [smem:[#allocation0]]
          %s280 = sadd.s32 2, %s279
          %s282 = sshll.u32 7, 26
          %s283 = sxor.u32 4294967295, %s282
          %s284 = sand.u32 0, %s283
          %s285 = sshll.u32 %s280, 26
          %s286 = sor.u32 %s284, %s285
          %s287 = sshll.u32 %s265, 4
          %s288 = int_to_ptr.vmem [resolvable:$true] %s287
          %294 = sst [smem:[#allocation14]] 4096
          %s295 = scalar_lea.smem [#allocation14], 1
          %296 = sst [smem:[%s295]] 2048
          %s297 = scalar_lea.smem [#allocation14], 2
          %298 = sst [smem:[%s297]] 16
          %s299 = scalar_lea.smem [#allocation14], 3
          %300 = sst [smem:[%s299]] 128
          %s301 = scalar_lea.smem [#allocation14], 4
          %302 = sst [smem:[%s301]] 128
          %s303 = scalar_lea.smem [#allocation14], 5
          %304 = sst [smem:[%s303]] 8
          %306 = dma.general %s274, 16384, %s288, %s262, [#allocation13], [#allocation14], %s286, 0
        $region28: #{tpu_custom_call.1} parent=15 // pred_fallthru
          _
      $region16: #{tpu_custom_call.1} parent=5 // pred_fallthru
        _
      %p307 = scmp.le.s32.totalorder 1, %s19
      %p308 = scmp.lt.s32.totalorder %s19, 3
      %p309 = pnand %p307, %p308
      %p310 = pneg %p309
      // Predicated region
      $region29: #{tpu_custom_call.1} parent=5 // pred_check
        _
      $region30: #{tpu_custom_call.1} parent=5 // pred_check_branch
        %312 = sbr.rel (%p309) target = $region32
      $region31: #{tpu_custom_call.1} parent=5 // pred_region
        %s313 = ssub.s32 %s19, 1
        %s314 = sand.u32 %s46, 1
        %s315 = scalar_lea.sflag [#allocation3], %s314
        %s316 = sand.u32 %s46, 1
        %s317 = smul.addr %s316, 8
        %s318 = scalar_lea.vmem [#allocation2], %s317
        // Predicated region
        $region33: #{tpu_custom_call.1} parent=31 // pred_check
          %p319 = pneg %p59
        $region34: #{tpu_custom_call.1} parent=31 // pred_check_branch
          %321 = sbr.rel (%p319) target = $region36
        $region35: #{tpu_custom_call.1} parent=31 // pred_region
          %322 = dma.done %s315, 128
        $region36: #{tpu_custom_call.1} parent=31 // pred_fallthru
          _
        %s323 = sand.u32 %s24, 1
        %s324 = scalar_lea.sflag [#allocation6], %s323
        %s325 = sand.u32 %s74, 1
        %s326 = smul.addr %s325, 1024
        %s327 = scalar_lea.vmem [#allocation5], %s326
        // Predicated region
        $region37: #{tpu_custom_call.1} parent=31 // pred_check
          %p328 = pneg %p87
        $region38: #{tpu_custom_call.1} parent=31 // pred_check_branch
          %330 = sbr.rel (%p328) target = $region40
        $region39: #{tpu_custom_call.1} parent=31 // pred_region
          %331 = dma.done %s324, 16384
        $region40: #{tpu_custom_call.1} parent=31 // pred_fallthru
          _
        %s332 = sand.u32 %s24, 1
        %s333 = scalar_lea.sflag [#allocation6], %s332
        %s334 = sand.u32 %s102, 1
        %s335 = smul.addr %s334, 1024
        %s336 = scalar_lea.vmem [#allocation7], %s335
        // Predicated region
        $region41: #{tpu_custom_call.1} parent=31 // pred_check
          %p337 = pneg %p115
        $region42: #{tpu_custom_call.1} parent=31 // pred_check_branch
          %339 = sbr.rel (%p337) target = $region44
        $region43: #{tpu_custom_call.1} parent=31 // pred_region
          %340 = dma.done %s333, 16384
        $region44: #{tpu_custom_call.1} parent=31 // pred_fallthru
          _
        %s341 = sand.u32 %s46, 1
        %s342 = scalar_lea.sflag [#allocation3], %s341
        %s343 = sand.u32 %s46, 1
        %s344 = smul.addr %s343, 8
        %s345 = scalar_lea.vmem [#allocation2], %s344
        %p346 = pneg %p59
        %p347 = pneg %p56
        %s348 = sand.u32 %s24, 1
        %s349 = scalar_lea.sflag [#allocation6], %s348
        %s350 = sand.u32 %s74, 1
        %s351 = smul.addr %s350, 1024
        %s352 = scalar_lea.vmem [#allocation5], %s351
        %p353 = pneg %p87
        %p354 = pneg %p84
        %s355 = sand.u32 %s24, 1
        %s356 = scalar_lea.sflag [#allocation6], %s355
        %s357 = sand.u32 %s102, 1
        %s358 = smul.addr %s357, 1024
        %s359 = scalar_lea.vmem [#allocation7], %s358
        %p360 = pneg %p115
        %p361 = pneg %p112
        %p362 = pneg %p141
        %p363 = pneg %p138
        %p364 = pneg %p167
        %p365 = pneg %p164
        %s366 = smul.u32 8, %s28
        %s367 = smul.u32 8, %s28
        %s368 = smul.u32 16, %s29
        %s369 = smul.u32 8, %s28
        %s370 = smul.u32 16, %s29
        %s371 = smul.u32 8, %s28
        %s372 = smul.u32 8, %s28
        %p373 = scmp.eq.s32.totalorder %s29, 0
        // Predicated region
        $region45: #{tpu_custom_call.1} parent=31 // pred_check
          %p374 = pneg %p373
        $region46: #{tpu_custom_call.1} parent=31 // pred_check_branch
          %376 = sbr.rel (%p374) target = $region48
        $region47: #{tpu_custom_call.1} parent=31 // pred_region
          %377 = vst [vmem:[#allocation8] sm:$0x1] 0.0
          %378 = vst [vmem:[#allocation8 + $0x1] sm:$0x1] 0.0
          %379 = vst [vmem:[#allocation8 + $0x2] sm:$0x1] 0.0
          %380 = vst [vmem:[#allocation8 + $0x3] sm:$0x1] 0.0
          %381 = vst [vmem:[#allocation8 + $0x4] sm:$0x1] 0.0
          %382 = vst [vmem:[#allocation8 + $0x5] sm:$0x1] 0.0
          %383 = vst [vmem:[#allocation8 + $0x6] sm:$0x1] 0.0
          %384 = vst [vmem:[#allocation8 + $0x7] sm:$0x1] 0.0
          %385 = vst [vmem:[#allocation9] sm:$0x1] 0.0
          %386 = vst [vmem:[#allocation9 + $0x1] sm:$0x1] 0.0
          %387 = vst [vmem:[#allocation9 + $0x2] sm:$0x1] 0.0
          %388 = vst [vmem:[#allocation9 + $0x3] sm:$0x1] 0.0
          %389 = vst [vmem:[#allocation9 + $0x4] sm:$0x1] 0.0
          %390 = vst [vmem:[#allocation9 + $0x5] sm:$0x1] 0.0
          %391 = vst [vmem:[#allocation9 + $0x6] sm:$0x1] 0.0
          %392 = vst [vmem:[#allocation9 + $0x7] sm:$0x1] 0.0
        $region48: #{tpu_custom_call.1} parent=31 // pred_fallthru
          _
        %v393 = vld [vmem:[%s318] sm:$0x1]
        %v394 = vld [vmem:[%s318 + $0x1] sm:$0x1]
        %v395 = vld [vmem:[%s318 + $0x2] sm:$0x1]
        %v396 = vld [vmem:[%s318 + $0x3] sm:$0x1]
        %v397 = vld [vmem:[%s318 + $0x4] sm:$0x1]
        %v398 = vld [vmem:[%s318 + $0x5] sm:$0x1]
        %v399 = vld [vmem:[%s318 + $0x6] sm:$0x1]
        %v400 = vld [vmem:[%s318 + $0x7] sm:$0x1]
        %v401 = vld [vmem:[#allocation8] sm:$0x1]
        %v402 = vld [vmem:[#allocation8 + $0x1] sm:$0x1]
        %v403 = vld [vmem:[#allocation8 + $0x2] sm:$0x1]
        %v404 = vld [vmem:[#allocation8 + $0x3] sm:$0x1]
        %v405 = vld [vmem:[#allocation8 + $0x4] sm:$0x1]
        %v406 = vld [vmem:[#allocation8 + $0x5] sm:$0x1]
        %v407 = vld [vmem:[#allocation8 + $0x6] sm:$0x1]
        %v408 = vld [vmem:[#allocation8 + $0x7] sm:$0x1]
        %v409 = vld [vmem:[%s327] sm:$0xff]
        %v410 = vld [vmem:[%s327 + $0x8] sm:$0xff]
        %v411 = vld [vmem:[%s327 + $0x10] sm:$0xff]
        %v412 = vld [vmem:[%s327 + $0x18] sm:$0xff]
        %v413 = vld [vmem:[%s327 + $0x20] sm:$0xff]
        %v414 = vld [vmem:[%s327 + $0x28] sm:$0xff]
        %v415 = vld [vmem:[%s327 + $0x30] sm:$0xff]
        %v416 = vld [vmem:[%s327 + $0x38] sm:$0xff]
        %v417 = vld [vmem:[%s327 + $0x40] sm:$0xff]
        %v418 = vld [vmem:[%s327 + $0x48] sm:$0xff]
        %v419 = vld [vmem:[%s327 + $0x50] sm:$0xff]
        %v420 = vld [vmem:[%s327 + $0x58] sm:$0xff]
        %v421 = vld [vmem:[%s327 + $0x60] sm:$0xff]
        %v422 = vld [vmem:[%s327 + $0x68] sm:$0xff]
        %v423 = vld [vmem:[%s327 + $0x70] sm:$0xff]
        %v424 = vld [vmem:[%s327 + $0x78] sm:$0xff]
        %v425 = vld [vmem:[%s327 + $0x80] sm:$0xff]
        %v426 = vld [vmem:[%s327 + $0x88] sm:$0xff]
        %v427 = vld [vmem:[%s327 + $0x90] sm:$0xff]
        %v428 = vld [vmem:[%s327 + $0x98] sm:$0xff]
        %v429 = vld [vmem:[%s327 + $0xa0] sm:$0xff]
        %v430 = vld [vmem:[%s327 + $0xa8] sm:$0xff]
        %v431 = vld [vmem:[%s327 + $0xb0] sm:$0xff]
        %v432 = vld [vmem:[%s327 + $0xb8] sm:$0xff]
        %v433 = vld [vmem:[%s327 + $0xc0] sm:$0xff]
        %v434 = vld [vmem:[%s327 + $0xc8] sm:$0xff]
        %v435 = vld [vmem:[%s327 + $0xd0] sm:$0xff]
        %v436 = vld [vmem:[%s327 + $0xd8] sm:$0xff]
        %v437 = vld [vmem:[%s327 + $0xe0] sm:$0xff]
        %v438 = vld [vmem:[%s327 + $0xe8] sm:$0xff]
        %v439 = vld [vmem:[%s327 + $0xf0] sm:$0xff]
        %v440 = vld [vmem:[%s327 + $0xf8] sm:$0xff]
        %v441 = vld [vmem:[%s327 + $0x100] sm:$0xff]
        %v442 = vld [vmem:[%s327 + $0x108] sm:$0xff]
        %v443 = vld [vmem:[%s327 + $0x110] sm:$0xff]
        %v444 = vld [vmem:[%s327 + $0x118] sm:$0xff]
        %v445 = vld [vmem:[%s327 + $0x120] sm:$0xff]
        %v446 = vld [vmem:[%s327 + $0x128] sm:$0xff]
        %v447 = vld [vmem:[%s327 + $0x130] sm:$0xff]
        %v448 = vld [vmem:[%s327 + $0x138] sm:$0xff]
        %v449 = vld [vmem:[%s327 + $0x140] sm:$0xff]
        %v450 = vld [vmem:[%s327 + $0x148] sm:$0xff]
        %v451 = vld [vmem:[%s327 + $0x150] sm:$0xff]
        %v452 = vld [vmem:[%s327 + $0x158] sm:$0xff]
        %v453 = vld [vmem:[%s327 + $0x160] sm:$0xff]
        %v454 = vld [vmem:[%s327 + $0x168] sm:$0xff]
        %v455 = vld [vmem:[%s327 + $0x170] sm:$0xff]
        %v456 = vld [vmem:[%s327 + $0x178] sm:$0xff]
        %v457 = vld [vmem:[%s327 + $0x180] sm:$0xff]
        %v458 = vld [vmem:[%s327 + $0x188] sm:$0xff]
        %v459 = vld [vmem:[%s327 + $0x190] sm:$0xff]
        %v460 = vld [vmem:[%s327 + $0x198] sm:$0xff]
        %v461 = vld [vmem:[%s327 + $0x1a0] sm:$0xff]
        %v462 = vld [vmem:[%s327 + $0x1a8] sm:$0xff]
        %v463 = vld [vmem:[%s327 + $0x1b0] sm:$0xff]
        %v464 = vld [vmem:[%s327 + $0x1b8] sm:$0xff]
        %v465 = vld [vmem:[%s327 + $0x1c0] sm:$0xff]
        %v466 = vld [vmem:[%s327 + $0x1c8] sm:$0xff]
        %v467 = vld [vmem:[%s327 + $0x1d0] sm:$0xff]
        %v468 = vld [vmem:[%s327 + $0x1d8] sm:$0xff]
        %v469 = vld [vmem:[%s327 + $0x1e0] sm:$0xff]
        %v470 = vld [vmem:[%s327 + $0x1e8] sm:$0xff]
        %v471 = vld [vmem:[%s327 + $0x1f0] sm:$0xff]
        %v472 = vld [vmem:[%s327 + $0x1f8] sm:$0xff]
        %v473 = vld [vmem:[%s327 + $0x200] sm:$0xff]
        %v474 = vld [vmem:[%s327 + $0x208] sm:$0xff]
        %v475 = vld [vmem:[%s327 + $0x210] sm:$0xff]
        %v476 = vld [vmem:[%s327 + $0x218] sm:$0xff]
        %v477 = vld [vmem:[%s327 + $0x220] sm:$0xff]
        %v478 = vld [vmem:[%s327 + $0x228] sm:$0xff]
        %v479 = vld [vmem:[%s327 + $0x230] sm:$0xff]
        %v480 = vld [vmem:[%s327 + $0x238] sm:$0xff]
        %v481 = vld [vmem:[%s327 + $0x240] sm:$0xff]
        %v482 = vld [vmem:[%s327 + $0x248] sm:$0xff]
        %v483 = vld [vmem:[%s327 + $0x250] sm:$0xff]
        %v484 = vld [vmem:[%s327 + $0x258] sm:$0xff]
        %v485 = vld [vmem:[%s327 + $0x260] sm:$0xff]
        %v486 = vld [vmem:[%s327 + $0x268] sm:$0xff]
        %v487 = vld [vmem:[%s327 + $0x270] sm:$0xff]
        %v488 = vld [vmem:[%s327 + $0x278] sm:$0xff]
        %v489 = vld [vmem:[%s327 + $0x280] sm:$0xff]
        %v490 = vld [vmem:[%s327 + $0x288] sm:$0xff]
        %v491 = vld [vmem:[%s327 + $0x290] sm:$0xff]
        %v492 = vld [vmem:[%s327 + $0x298] sm:$0xff]
        %v493 = vld [vmem:[%s327 + $0x2a0] sm:$0xff]
        %v494 = vld [vmem:[%s327 + $0x2a8] sm:$0xff]
        %v495 = vld [vmem:[%s327 + $0x2b0] sm:$0xff]
        %v496 = vld [vmem:[%s327 + $0x2b8] sm:$0xff]
        %v497 = vld [vmem:[%s327 + $0x2c0] sm:$0xff]
        %v498 = vld [vmem:[%s327 + $0x2c8] sm:$0xff]
        %v499 = vld [vmem:[%s327 + $0x2d0] sm:$0xff]
        %v500 = vld [vmem:[%s327 + $0x2d8] sm:$0xff]
        %v501 = vld [vmem:[%s327 + $0x2e0] sm:$0xff]
        %v502 = vld [vmem:[%s327 + $0x2e8] sm:$0xff]
        %v503 = vld [vmem:[%s327 + $0x2f0] sm:$0xff]
        %v504 = vld [vmem:[%s327 + $0x2f8] sm:$0xff]
        %v505 = vld [vmem:[%s327 + $0x300] sm:$0xff]
        %v506 = vld [vmem:[%s327 + $0x308] sm:$0xff]
        %v507 = vld [vmem:[%s327 + $0x310] sm:$0xff]
        %v508 = vld [vmem:[%s327 + $0x318] sm:$0xff]
        %v509 = vld [vmem:[%s327 + $0x320] sm:$0xff]
        %v510 = vld [vmem:[%s327 + $0x328] sm:$0xff]
        %v511 = vld [vmem:[%s327 + $0x330] sm:$0xff]
        %v512 = vld [vmem:[%s327 + $0x338] sm:$0xff]
        %v513 = vld [vmem:[%s327 + $0x340] sm:$0xff]
        %v514 = vld [vmem:[%s327 + $0x348] sm:$0xff]
        %v515 = vld [vmem:[%s327 + $0x350] sm:$0xff]
        %v516 = vld [vmem:[%s327 + $0x358] sm:$0xff]
        %v517 = vld [vmem:[%s327 + $0x360] sm:$0xff]
        %v518 = vld [vmem:[%s327 + $0x368] sm:$0xff]
        %v519 = vld [vmem:[%s327 + $0x370] sm:$0xff]
        %v520 = vld [vmem:[%s327 + $0x378] sm:$0xff]
        %v521 = vld [vmem:[%s327 + $0x380] sm:$0xff]
        %v522 = vld [vmem:[%s327 + $0x388] sm:$0xff]
        %v523 = vld [vmem:[%s327 + $0x390] sm:$0xff]
        %v524 = vld [vmem:[%s327 + $0x398] sm:$0xff]
        %v525 = vld [vmem:[%s327 + $0x3a0] sm:$0xff]
        %v526 = vld [vmem:[%s327 + $0x3a8] sm:$0xff]
        %v527 = vld [vmem:[%s327 + $0x3b0] sm:$0xff]
        %v528 = vld [vmem:[%s327 + $0x3b8] sm:$0xff]
        %v529 = vld [vmem:[%s327 + $0x3c0] sm:$0xff]
        %v530 = vld [vmem:[%s327 + $0x3c8] sm:$0xff]
        %v531 = vld [vmem:[%s327 + $0x3d0] sm:$0xff]
        %v532 = vld [vmem:[%s327 + $0x3d8] sm:$0xff]
        %v533 = vld [vmem:[%s327 + $0x3e0] sm:$0xff]
        %v534 = vld [vmem:[%s327 + $0x3e8] sm:$0xff]
        %v535 = vld [vmem:[%s327 + $0x3f0] sm:$0xff]
        %v536 = vld [vmem:[%s327 + $0x3f8] sm:$0xff]
        %537 = vmatprep.subr.mxu0 0.0
        %538 = vmatpush1.msra.mxu0 %v409
        %539 = vmatprep.subr.mxu0 0.0
        %540 = vmatpush1.msra.mxu0 %v410
        %541 = vmatprep.subr.mxu0 0.0
        %542 = vmatpush1.msra.mxu0 %v411
        %543 = vmatprep.subr.mxu0 0.0
        %544 = vmatpush1.msra.mxu0 %v412
        %545 = vmatprep.subr.mxu0 0.0
        %546 = vmatpush1.msra.mxu0 %v413
        %547 = vmatprep.subr.mxu0 0.0
        %548 = vmatpush1.msra.mxu0 %v414
        %549 = vmatprep.subr.mxu0 0.0
        %550 = vmatpush1.msra.mxu0 %v415
        %551 = vmatprep.subr.mxu0 0.0
        %552 = vmatpush1.msra.mxu0 %v416
        %553 = vmatprep.subr.mxu0 0.0
        %554 = vmatpush1.msra.mxu0 %v417
        %555 = vmatprep.subr.mxu0 0.0
        %556 = vmatpush1.msra.mxu0 %v418
        %557 = vmatprep.subr.mxu0 0.0
        %558 = vmatpush1.msra.mxu0 %v419
        %559 = vmatprep.subr.mxu0 0.0
        %560 = vmatpush1.msra.mxu0 %v420
        %561 = vmatprep.subr.mxu0 0.0
        %562 = vmatpush1.msra.mxu0 %v421
        %563 = vmatprep.subr.mxu0 0.0
        %564 = vmatpush1.msra.mxu0 %v422
        %565 = vmatprep.subr.mxu0 0.0
        %566 = vmatpush1.msra.mxu0 %v423
        %567 = vmatprep.subr.mxu0 0.0
        %568 = vmatpush1.msra.mxu0 %v424
        %569 = vmatprep.subr.mxu0 0.0
        %570 = vmatpush1.msra.mxu0 0.0
        %571 = vmatprep.subr.mxu0 0.0
        %572 = vmatpush1.msra.mxu0 0.0
        %573 = vmatprep.subr.mxu0 0.0
        %574 = vmatpush1.msra.mxu0 0.0
        %575 = vmatprep.subr.mxu0 0.0
        %576 = vmatpush1.msra.mxu0 0.0
        %577 = vmatprep.subr.mxu0 0.0
        %578 = vmatpush1.msra.mxu0 0.0
        %579 = vmatprep.subr.mxu0 0.0
        %580 = vmatpush1.msra.mxu0 0.0
        %581 = vmatprep.subr.mxu0 0.0
        %582 = vmatpush1.msra.mxu0 0.0
        %583 = vmatprep.subr.mxu0 0.0
        %584 = vmatpush1.msra.mxu0 0.0
        %585 = vmatprep.subr.mxu0 0.0
        %586 = vmatpush1.msra.mxu0 0.0
        %587 = vmatprep.subr.mxu0 0.0
        %588 = vmatpush1.msra.mxu0 0.0
        %589 = vmatprep.subr.mxu0 0.0
        %590 = vmatpush1.msra.mxu0 0.0
        %591 = vmatprep.subr.mxu0 0.0
        %592 = vmatpush1.msra.mxu0 0.0
        %593 = vmatprep.subr.mxu0 0.0
        %594 = vmatpush1.msra.mxu0 0.0
        %595 = vmatprep.subr.mxu0 0.0
        %596 = vmatpush1.msra.mxu0 0.0
        %597 = vmatprep.subr.mxu0 0.0
        %598 = vmatpush1.msra.mxu0 0.0
        %599 = vmatprep.subr.mxu0 0.0
        %600 = vmatpush1.msra.mxu0 0.0
        %601 = vmatprep.mubr.f32.mxu0 0.0
        %602 = vmatmul.mubr.f32.gmra.mrb[0].mxu0 %v393
        %v603 = vpop.f32.mrb[0].mxu0
        %v604 = vadd.f32 0.0, %v603
        %v605 = vpop.f32.mrb[0].mxu0
        %606 = vdwg.mxu0
        %607 = vmatprep.subr.mxu0 0.0
        %608 = vmatpush1.msra.mxu0 %v425
        %609 = vmatprep.subr.mxu0 0.0
        %610 = vmatpush1.msra.mxu0 %v426
        %611 = vmatprep.subr.mxu0 0.0
        %612 = vmatpush1.msra.mxu0 %v427
        %613 = vmatprep.subr.mxu0 0.0
        %614 = vmatpush1.msra.mxu0 %v428
        %615 = vmatprep.subr.mxu0 0.0
        %616 = vmatpush1.msra.mxu0 %v429
        %617 = vmatprep.subr.mxu0 0.0
        %618 = vmatpush1.msra.mxu0 %v430
        %619 = vmatprep.subr.mxu0 0.0
        %620 = vmatpush1.msra.mxu0 %v431
        %621 = vmatprep.subr.mxu0 0.0
        %622 = vmatpush1.msra.mxu0 %v432
        %623 = vmatprep.subr.mxu0 0.0
        %624 = vmatpush1.msra.mxu0 %v433
        %625 = vmatprep.subr.mxu0 0.0
        %626 = vmatpush1.msra.mxu0 %v434
        %627 = vmatprep.subr.mxu0 0.0
        %628 = vmatpush1.msra.mxu0 %v435
        %629 = vmatprep.subr.mxu0 0.0
        %630 = vmatpush1.msra.mxu0 %v436
        %631 = vmatprep.subr.mxu0 0.0
        %632 = vmatpush1.msra.mxu0 %v437
        %633 = vmatprep.subr.mxu0 0.0
        %634 = vmatpush1.msra.mxu0 %v438
        %635 = vmatprep.subr.mxu0 0.0
        %636 = vmatpush1.msra.mxu0 %v439
        %637 = vmatprep.subr.mxu0 0.0
        %638 = vmatpush1.msra.mxu0 %v440
        %639 = vmatprep.subr.mxu0 0.0
        %640 = vmatpush1.msra.mxu0 0.0
        %641 = vmatprep.subr.mxu0 0.0
        %642 = vmatpush1.msra.mxu0 0.0
        %643 = vmatprep.subr.mxu0 0.0
        %644 = vmatpush1.msra.mxu0 0.0
        %645 = vmatprep.subr.mxu0 0.0
        %646 = vmatpush1.msra.mxu0 0.0
        %647 = vmatprep.subr.mxu0 0.0
        %648 = vmatpush1.msra.mxu0 0.0
        %649 = vmatprep.subr.mxu0 0.0
        %650 = vmatpush1.msra.mxu0 0.0
        %651 = vmatprep.subr.mxu0 0.0
        %652 = vmatpush1.msra.mxu0 0.0
        %653 = vmatprep.subr.mxu0 0.0
        %654 = vmatpush1.msra.mxu0 0.0
        %655 = vmatprep.subr.mxu0 0.0
        %656 = vmatpush1.msra.mxu0 0.0
        %657 = vmatprep.subr.mxu0 0.0
        %658 = vmatpush1.msra.mxu0 0.0
        %659 = vmatprep.subr.mxu0 0.0
        %660 = vmatpush1.msra.mxu0 0.0
        %661 = vmatprep.subr.mxu0 0.0
        %662 = vmatpush1.msra.mxu0 0.0
        %663 = vmatprep.subr.mxu0 0.0
        %664 = vmatpush1.msra.mxu0 0.0
        %665 = vmatprep.subr.mxu0 0.0
        %666 = vmatpush1.msra.mxu0 0.0
        %667 = vmatprep.subr.mxu0 0.0
        %668 = vmatpush1.msra.mxu0 0.0
        %669 = vmatprep.subr.mxu0 0.0
        %670 = vmatpush1.msra.mxu0 0.0
        %671 = vmatprep.mubr.f32.mxu0 0.0
        %672 = vmatmul.mubr.f32.gmra.mrb[0].mxu0 %v394
        %v673 = vpop.f32.mrb[0].mxu0
        %v674 = vadd.f32 0.0, %v673
        %v675 = vpop.f32.mrb[0].mxu0
        %676 = vdwg.mxu0
        %677 = vmatprep.subr.mxu0 0.0
        %678 = vmatpush1.msra.mxu0 %v441
        %679 = vmatprep.subr.mxu0 0.0
        %680 = vmatpush1.msra.mxu0 %v442
        %681 = vmatprep.subr.mxu0 0.0
        %682 = vmatpush1.msra.mxu0 %v443
        %683 = vmatprep.subr.mxu0 0.0
        %684 = vmatpush1.msra.mxu0 %v444
        %685 = vmatprep.subr.mxu0 0.0
        %686 = vmatpush1.msra.mxu0 %v445
        %687 = vmatprep.subr.mxu0 0.0
        %688 = vmatpush1.msra.mxu0 %v446
        %689 = vmatprep.subr.mxu0 0.0
        %690 = vmatpush1.msra.mxu0 %v447
        %691 = vmatprep.subr.mxu0 0.0
        %692 = vmatpush1.msra.mxu0 %v448
        %693 = vmatprep.subr.mxu0 0.0
        %694 = vmatpush1.msra.mxu0 %v449
        %695 = vmatprep.subr.mxu0 0.0
        %696 = vmatpush1.msra.mxu0 %v450
        %697 = vmatprep.subr.mxu0 0.0
        %698 = vmatpush1.msra.mxu0 %v451
        %699 = vmatprep.subr.mxu0 0.0
        %700 = vmatpush1.msra.mxu0 %v452
        %701 = vmatprep.subr.mxu0 0.0
        %702 = vmatpush1.msra.mxu0 %v453
        %703 = vmatprep.subr.mxu0 0.0
        %704 = vmatpush1.msra.mxu0 %v454
        %705 = vmatprep.subr.mxu0 0.0
        %706 = vmatpush1.msra.mxu0 %v455
        %707 = vmatprep.subr.mxu0 0.0
        %708 = vmatpush1.msra.mxu0 %v456
        %709 = vmatprep.subr.mxu0 0.0
        %710 = vmatpush1.msra.mxu0 0.0
        %711 = vmatprep.subr.mxu0 0.0
        %712 = vmatpush1.msra.mxu0 0.0
        %713 = vmatprep.subr.mxu0 0.0
        %714 = vmatpush1.msra.mxu0 0.0
        %715 = vmatprep.subr.mxu0 0.0
        %716 = vmatpush1.msra.mxu0 0.0
        %717 = vmatprep.subr.mxu0 0.0
        %718 = vmatpush1.msra.mxu0 0.0
        %719 = vmatprep.subr.mxu0 0.0
        %720 = vmatpush1.msra.mxu0 0.0
        %721 = vmatprep.subr.mxu0 0.0
        %722 = vmatpush1.msra.mxu0 0.0
        %723 = vmatprep.subr.mxu0 0.0
        %724 = vmatpush1.msra.mxu0 0.0
        %725 = vmatprep.subr.mxu0 0.0
        %726 = vmatpush1.msra.mxu0 0.0
        %727 = vmatprep.subr.mxu0 0.0
        %728 = vmatpush1.msra.mxu0 0.0
        %729 = vmatprep.subr.mxu0 0.0
        %730 = vmatpush1.msra.mxu0 0.0
        %731 = vmatprep.subr.mxu0 0.0
        %732 = vmatpush1.msra.mxu0 0.0
        %733 = vmatprep.subr.mxu0 0.0
        %734 = vmatpush1.msra.mxu0 0.0
        %735 = vmatprep.subr.mxu0 0.0
        %736 = vmatpush1.msra.mxu0 0.0
        %737 = vmatprep.subr.mxu0 0.0
        %738 = vmatpush1.msra.mxu0 0.0
        %739 = vmatprep.subr.mxu0 0.0
        %740 = vmatpush1.msra.mxu0 0.0
        %741 = vmatprep.mubr.f32.mxu0 0.0
        %742 = vmatmul.mubr.f32.gmra.mrb[0].mxu0 %v395
        %v743 = vpop.f32.mrb[0].mxu0
        %v744 = vadd.f32 0.0, %v743
        %v745 = vpop.f32.mrb[0].mxu0
        %746 = vdwg.mxu0
        %747 = vmatprep.subr.mxu0 0.0
        %748 = vmatpush1.msra.mxu0 %v457
        %749 = vmatprep.subr.mxu0 0.0
        %750 = vmatpush1.msra.mxu0 %v458
        %751 = vmatprep.subr.mxu0 0.0
        %752 = vmatpush1.msra.mxu0 %v459
        %753 = vmatprep.subr.mxu0 0.0
        %754 = vmatpush1.msra.mxu0 %v460
        %755 = vmatprep.subr.mxu0 0.0
        %756 = vmatpush1.msra.mxu0 %v461
        %757 = vmatprep.subr.mxu0 0.0
        %758 = vmatpush1.msra.mxu0 %v462
        %759 = vmatprep.subr.mxu0 0.0
        %760 = vmatpush1.msra.mxu0 %v463
        %761 = vmatprep.subr.mxu0 0.0
        %762 = vmatpush1.msra.mxu0 %v464
        %763 = vmatprep.subr.mxu0 0.0
        %764 = vmatpush1.msra.mxu0 %v465
        %765 = vmatprep.subr.mxu0 0.0
        %766 = vmatpush1.msra.mxu0 %v466
        %767 = vmatprep.subr.mxu0 0.0
        %768 = vmatpush1.msra.mxu0 %v467
        %769 = vmatprep.subr.mxu0 0.0
        %770 = vmatpush1.msra.mxu0 %v468
        %771 = vmatprep.subr.mxu0 0.0
        %772 = vmatpush1.msra.mxu0 %v469
        %773 = vmatprep.subr.mxu0 0.0
        %774 = vmatpush1.msra.mxu0 %v470
        %775 = vmatprep.subr.mxu0 0.0
        %776 = vmatpush1.msra.mxu0 %v471
        %777 = vmatprep.subr.mxu0 0.0
        %778 = vmatpush1.msra.mxu0 %v472
        %779 = vmatprep.subr.mxu0 0.0
        %780 = vmatpush1.msra.mxu0 0.0
        %781 = vmatprep.subr.mxu0 0.0
        %782 = vmatpush1.msra.mxu0 0.0
        %783 = vmatprep.subr.mxu0 0.0
        %784 = vmatpush1.msra.mxu0 0.0
        %785 = vmatprep.subr.mxu0 0.0
        %786 = vmatpush1.msra.mxu0 0.0
        %787 = vmatprep.subr.mxu0 0.0
        %788 = vmatpush1.msra.mxu0 0.0
        %789 = vmatprep.subr.mxu0 0.0
        %790 = vmatpush1.msra.mxu0 0.0
        %791 = vmatprep.subr.mxu0 0.0
        %792 = vmatpush1.msra.mxu0 0.0
        %793 = vmatprep.subr.mxu0 0.0
        %794 = vmatpush1.msra.mxu0 0.0
        %795 = vmatprep.subr.mxu0 0.0
        %796 = vmatpush1.msra.mxu0 0.0
        %797 = vmatprep.subr.mxu0 0.0
        %798 = vmatpush1.msra.mxu0 0.0
        %799 = vmatprep.subr.mxu0 0.0
        %800 = vmatpush1.msra.mxu0 0.0
        %801 = vmatprep.subr.mxu0 0.0
        %802 = vmatpush1.msra.mxu0 0.0
        %803 = vmatprep.subr.mxu0 0.0
        %804 = vmatpush1.msra.mxu0 0.0
        %805 = vmatprep.subr.mxu0 0.0
        %806 = vmatpush1.msra.mxu0 0.0
        %807 = vmatprep.subr.mxu0 0.0
        %808 = vmatpush1.msra.mxu0 0.0
        %809 = vmatprep.subr.mxu0 0.0
        %810 = vmatpush1.msra.mxu0 0.0
        %811 = vmatprep.mubr.f32.mxu0 0.0
        %812 = vmatmul.mubr.f32.gmra.mrb[0].mxu0 %v396
        %v813 = vpop.f32.mrb[0].mxu0
        %v814 = vadd.f32 0.0, %v813
        %v815 = vpop.f32.mrb[0].mxu0
        %816 = vdwg.mxu0
        %817 = vmatprep.subr.mxu0 0.0
        %818 = vmatpush1.msra.mxu0 %v473
        %819 = vmatprep.subr.mxu0 0.0
        %820 = vmatpush1.msra.mxu0 %v474
        %821 = vmatprep.subr.mxu0 0.0
        %822 = vmatpush1.msra.mxu0 %v475
        %823 = vmatprep.subr.mxu0 0.0
        %824 = vmatpush1.msra.mxu0 %v476
        %825 = vmatprep.subr.mxu0 0.0
        %826 = vmatpush1.msra.mxu0 %v477
        %827 = vmatprep.subr.mxu0 0.0
        %828 = vmatpush1.msra.mxu0 %v478
        %829 = vmatprep.subr.mxu0 0.0
        %830 = vmatpush1.msra.mxu0 %v479
        %831 = vmatprep.subr.mxu0 0.0
        %832 = vmatpush1.msra.mxu0 %v480
        %833 = vmatprep.subr.mxu0 0.0
        %834 = vmatpush1.msra.mxu0 %v481
        %835 = vmatprep.subr.mxu0 0.0
        %836 = vmatpush1.msra.mxu0 %v482
        %837 = vmatprep.subr.mxu0 0.0
        %838 = vmatpush1.msra.mxu0 %v483
        %839 = vmatprep.subr.mxu0 0.0
        %840 = vmatpush1.msra.mxu0 %v484
        %841 = vmatprep.subr.mxu0 0.0
        %842 = vmatpush1.msra.mxu0 %v485
        %843 = vmatprep.subr.mxu0 0.0
        %844 = vmatpush1.msra.mxu0 %v486
        %845 = vmatprep.subr.mxu0 0.0
        %846 = vmatpush1.msra.mxu0 %v487
        %847 = vmatprep.subr.mxu0 0.0
        %848 = vmatpush1.msra.mxu0 %v488
        %849 = vmatprep.subr.mxu0 0.0
        %850 = vmatpush1.msra.mxu0 0.0
        %851 = vmatprep.subr.mxu0 0.0
        %852 = vmatpush1.msra.mxu0 0.0
        %853 = vmatprep.subr.mxu0 0.0
        %854 = vmatpush1.msra.mxu0 0.0
        %855 = vmatprep.subr.mxu0 0.0
        %856 = vmatpush1.msra.mxu0 0.0
        %857 = vmatprep.subr.mxu0 0.0
        %858 = vmatpush1.msra.mxu0 0.0
        %859 = vmatprep.subr.mxu0 0.0
        %860 = vmatpush1.msra.mxu0 0.0
        %861 = vmatprep.subr.mxu0 0.0
        %862 = vmatpush1.msra.mxu0 0.0
        %863 = vmatprep.subr.mxu0 0.0
        %864 = vmatpush1.msra.mxu0 0.0
        %865 = vmatprep.subr.mxu0 0.0
        %866 = vmatpush1.msra.mxu0 0.0
        %867 = vmatprep.subr.mxu0 0.0
        %868 = vmatpush1.msra.mxu0 0.0
        %869 = vmatprep.subr.mxu0 0.0
        %870 = vmatpush1.msra.mxu0 0.0
        %871 = vmatprep.subr.mxu0 0.0
        %872 = vmatpush1.msra.mxu0 0.0
        %873 = vmatprep.subr.mxu0 0.0
        %874 = vmatpush1.msra.mxu0 0.0
        %875 = vmatprep.subr.mxu0 0.0
        %876 = vmatpush1.msra.mxu0 0.0
        %877 = vmatprep.subr.mxu0 0.0
        %878 = vmatpush1.msra.mxu0 0.0
        %879 = vmatprep.subr.mxu0 0.0
        %880 = vmatpush1.msra.mxu0 0.0
        %881 = vmatprep.mubr.f32.mxu0 0.0
        %882 = vmatmul.mubr.f32.gmra.mrb[0].mxu0 %v397
        %v883 = vpop.f32.mrb[0].mxu0
        %v884 = vadd.f32 0.0, %v883
        %v885 = vpop.f32.mrb[0].mxu0
        %886 = vdwg.mxu0
        %887 = vmatprep.subr.mxu0 0.0
        %888 = vmatpush1.msra.mxu0 %v489
        %889 = vmatprep.subr.mxu0 0.0
        %890 = vmatpush1.msra.mxu0 %v490
        %891 = vmatprep.subr.mxu0 0.0
        %892 = vmatpush1.msra.mxu0 %v491
        %893 = vmatprep.subr.mxu0 0.0
        %894 = vmatpush1.msra.mxu0 %v492
        %895 = vmatprep.subr.mxu0 0.0
        %896 = vmatpush1.msra.mxu0 %v493
        %897 = vmatprep.subr.mxu0 0.0
        %898 = vmatpush1.msra.mxu0 %v494
        %899 = vmatprep.subr.mxu0 0.0
        %900 = vmatpush1.msra.mxu0 %v495
        %901 = vmatprep.subr.mxu0 0.0
        %902 = vmatpush1.msra.mxu0 %v496
        %903 = vmatprep.subr.mxu0 0.0
        %904 = vmatpush1.msra.mxu0 %v497
        %905 = vmatprep.subr.mxu0 0.0
        %906 = vmatpush1.msra.mxu0 %v498
        %907 = vmatprep.subr.mxu0 0.0
        %908 = vmatpush1.msra.mxu0 %v499
        %909 = vmatprep.subr.mxu0 0.0
        %910 = vmatpush1.msra.mxu0 %v500
        %911 = vmatprep.subr.mxu0 0.0
        %912 = vmatpush1.msra.mxu0 %v501
        %913 = vmatprep.subr.mxu0 0.0
        %914 = vmatpush1.msra.mxu0 %v502
        %915 = vmatprep.subr.mxu0 0.0
        %916 = vmatpush1.msra.mxu0 %v503
        %917 = vmatprep.subr.mxu0 0.0
        %918 = vmatpush1.msra.mxu0 %v504
        %919 = vmatprep.subr.mxu0 0.0
        %920 = vmatpush1.msra.mxu0 0.0
        %921 = vmatprep.subr.mxu0 0.0
        %922 = vmatpush1.msra.mxu0 0.0
        %923 = vmatprep.subr.mxu0 0.0
        %924 = vmatpush1.msra.mxu0 0.0
        %925 = vmatprep.subr.mxu0 0.0
        %926 = vmatpush1.msra.mxu0 0.0
        %927 = vmatprep.subr.mxu0 0.0
        %928 = vmatpush1.msra.mxu0 0.0
        %929 = vmatprep.subr.mxu0 0.0
        %930 = vmatpush1.msra.mxu0 0.0
        %931 = vmatprep.subr.mxu0 0.0
        %932 = vmatpush1.msra.mxu0 0.0
        %933 = vmatprep.subr.mxu0 0.0
        %934 = vmatpush1.msra.mxu0 0.0
        %935 = vmatprep.subr.mxu0 0.0
        %936 = vmatpush1.msra.mxu0 0.0
        %937 = vmatprep.subr.mxu0 0.0
        %938 = vmatpush1.msra.mxu0 0.0
        %939 = vmatprep.subr.mxu0 0.0
        %940 = vmatpush1.msra.mxu0 0.0
        %941 = vmatprep.subr.mxu0 0.0
        %942 = vmatpush1.msra.mxu0 0.0
        %943 = vmatprep.subr.mxu0 0.0
        %944 = vmatpush1.msra.mxu0 0.0
        %945 = vmatprep.subr.mxu0 0.0
        %946 = vmatpush1.msra.mxu0 0.0
        %947 = vmatprep.subr.mxu0 0.0
        %948 = vmatpush1.msra.mxu0 0.0
        %949 = vmatprep.subr.mxu0 0.0
        %950 = vmatpush1.msra.mxu0 0.0
        %951 = vmatprep.mubr.f32.mxu0 0.0
        %952 = vmatmul.mubr.f32.gmra.mrb[0].mxu0 %v398
        %v953 = vpop.f32.mrb[0].mxu0
        %v954 = vadd.f32 0.0, %v953
        %v955 = vpop.f32.mrb[0].mxu0
        %956 = vdwg.mxu0
        %957 = vmatprep.subr.mxu0 0.0
        %958 = vmatpush1.msra.mxu0 %v505
        %959 = vmatprep.subr.mxu0 0.0
        %960 = vmatpush1.msra.mxu0 %v506
        %961 = vmatprep.subr.mxu0 0.0
        %962 = vmatpush1.msra.mxu0 %v507
        %963 = vmatprep.subr.mxu0 0.0
        %964 = vmatpush1.msra.mxu0 %v508
        %965 = vmatprep.subr.mxu0 0.0
        %966 = vmatpush1.msra.mxu0 %v509
        %967 = vmatprep.subr.mxu0 0.0
        %968 = vmatpush1.msra.mxu0 %v510
        %969 = vmatprep.subr.mxu0 0.0
        %970 = vmatpush1.msra.mxu0 %v511
        %971 = vmatprep.subr.mxu0 0.0
        %972 = vmatpush1.msra.mxu0 %v512
        %973 = vmatprep.subr.mxu0 0.0
        %974 = vmatpush1.msra.mxu0 %v513
        %975 = vmatprep.subr.mxu0 0.0
        %976 = vmatpush1.msra.mxu0 %v514
        %977 = vmatprep.subr.mxu0 0.0
        %978 = vmatpush1.msra.mxu0 %v515
        %979 = vmatprep.subr.mxu0 0.0
        %980 = vmatpush1.msra.mxu0 %v516
        %981 = vmatprep.subr.mxu0 0.0
        %982 = vmatpush1.msra.mxu0 %v517
        %983 = vmatprep.subr.mxu0 0.0
        %984 = vmatpush1.msra.mxu0 %v518
        %985 = vmatprep.subr.mxu0 0.0
        %986 = vmatpush1.msra.mxu0 %v519
        %987 = vmatprep.subr.mxu0 0.0
        %988 = vmatpush1.msra.mxu0 %v520
        %989 = vmatprep.subr.mxu0 0.0
        %990 = vmatpush1.msra.mxu0 0.0
        %991 = vmatprep.subr.mxu0 0.0
        %992 = vmatpush1.msra.mxu0 0.0
        %993 = vmatprep.subr.mxu0 0.0
        %994 = vmatpush1.msra.mxu0 0.0
        %995 = vmatprep.subr.mxu0 0.0
        %996 = vmatpush1.msra.mxu0 0.0
        %997 = vmatprep.subr.mxu0 0.0
        %998 = vmatpush1.msra.mxu0 0.0
        %999 = vmatprep.subr.mxu0 0.0
        %1000 = vmatpush1.msra.mxu0 0.0
        %1001 = vmatprep.subr.mxu0 0.0
        %1002 = vmatpush1.msra.mxu0 0.0
        %1003 = vmatprep.subr.mxu0 0.0
        %1004 = vmatpush1.msra.mxu0 0.0
        %1005 = vmatprep.subr.mxu0 0.0
        %1006 = vmatpush1.msra.mxu0 0.0
        %1007 = vmatprep.subr.mxu0 0.0
        %1008 = vmatpush1.msra.mxu0 0.0
        %1009 = vmatprep.subr.mxu0 0.0
        %1010 = vmatpush1.msra.mxu0 0.0
        %1011 = vmatprep.subr.mxu0 0.0
        %1012 = vmatpush1.msra.mxu0 0.0
        %1013 = vmatprep.subr.mxu0 0.0
        %1014 = vmatpush1.msra.mxu0 0.0
        %1015 = vmatprep.subr.mxu0 0.0
        %1016 = vmatpush1.msra.mxu0 0.0
        %1017 = vmatprep.subr.mxu0 0.0
        %1018 = vmatpush1.msra.mxu0 0.0
        %1019 = vmatprep.subr.mxu0 0.0
        %1020 = vmatpush1.msra.mxu0 0.0
        %1021 = vmatprep.mubr.f32.mxu0 0.0
        %1022 = vmatmul.mubr.f32.gmra.mrb[0].mxu0 %v399
        %v1023 = vpop.f32.mrb[0].mxu0
        %v1024 = vadd.f32 0.0, %v1023
        %v1025 = vpop.f32.mrb[0].mxu0
        %1026 = vdwg.mxu0
        %1027 = vmatprep.subr.mxu0 0.0
        %1028 = vmatpush1.msra.mxu0 %v521
        %1029 = vmatprep.subr.mxu0 0.0
        %1030 = vmatpush1.msra.mxu0 %v522
        %1031 = vmatprep.subr.mxu0 0.0
        %1032 = vmatpush1.msra.mxu0 %v523
        %1033 = vmatprep.subr.mxu0 0.0
        %1034 = vmatpush1.msra.mxu0 %v524
        %1035 = vmatprep.subr.mxu0 0.0
        %1036 = vmatpush1.msra.mxu0 %v525
        %1037 = vmatprep.subr.mxu0 0.0
        %1038 = vmatpush1.msra.mxu0 %v526
        %1039 = vmatprep.subr.mxu0 0.0
        %1040 = vmatpush1.msra.mxu0 %v527
        %1041 = vmatprep.subr.mxu0 0.0
        %1042 = vmatpush1.msra.mxu0 %v528
        %1043 = vmatprep.subr.mxu0 0.0
        %1044 = vmatpush1.msra.mxu0 %v529
        %1045 = vmatprep.subr.mxu0 0.0
        %1046 = vmatpush1.msra.mxu0 %v530
        %1047 = vmatprep.subr.mxu0 0.0
        %1048 = vmatpush1.msra.mxu0 %v531
        %1049 = vmatprep.subr.mxu0 0.0
        %1050 = vmatpush1.msra.mxu0 %v532
        %1051 = vmatprep.subr.mxu0 0.0
        %1052 = vmatpush1.msra.mxu0 %v533
        %1053 = vmatprep.subr.mxu0 0.0
        %1054 = vmatpush1.msra.mxu0 %v534
        %1055 = vmatprep.subr.mxu0 0.0
        %1056 = vmatpush1.msra.mxu0 %v535
        %1057 = vmatprep.subr.mxu0 0.0
        %1058 = vmatpush1.msra.mxu0 %v536
        %1059 = vmatprep.subr.mxu0 0.0
        %1060 = vmatpush1.msra.mxu0 0.0
        %1061 = vmatprep.subr.mxu0 0.0
        %1062 = vmatpush1.msra.mxu0 0.0
        %1063 = vmatprep.subr.mxu0 0.0
        %1064 = vmatpush1.msra.mxu0 0.0
        %1065 = vmatprep.subr.mxu0 0.0
        %1066 = vmatpush1.msra.mxu0 0.0
        %1067 = vmatprep.subr.mxu0 0.0
        %1068 = vmatpush1.msra.mxu0 0.0
        %1069 = vmatprep.subr.mxu0 0.0
        %1070 = vmatpush1.msra.mxu0 0.0
        %1071 = vmatprep.subr.mxu0 0.0
        %1072 = vmatpush1.msra.mxu0 0.0
        %1073 = vmatprep.subr.mxu0 0.0
        %1074 = vmatpush1.msra.mxu0 0.0
        %1075 = vmatprep.subr.mxu0 0.0
        %1076 = vmatpush1.msra.mxu0 0.0
        %1077 = vmatprep.subr.mxu0 0.0
        %1078 = vmatpush1.msra.mxu0 0.0
        %1079 = vmatprep.subr.mxu0 0.0
        %1080 = vmatpush1.msra.mxu0 0.0
        %1081 = vmatprep.subr.mxu0 0.0
        %1082 = vmatpush1.msra.mxu0 0.0
        %1083 = vmatprep.subr.mxu0 0.0
        %1084 = vmatpush1.msra.mxu0 0.0
        %1085 = vmatprep.subr.mxu0 0.0
        %1086 = vmatpush1.msra.mxu0 0.0
        %1087 = vmatprep.subr.mxu0 0.0
        %1088 = vmatpush1.msra.mxu0 0.0
        %1089 = vmatprep.subr.mxu0 0.0
        %1090 = vmatpush1.msra.mxu0 0.0
        %1091 = vmatprep.mubr.f32.mxu0 0.0
        %1092 = vmatmul.mubr.f32.gmra.mrb[0].mxu0 %v400
        %v1093 = vpop.f32.mrb[0].mxu0
        %v1094 = vadd.f32 0.0, %v1093
        %v1095 = vpop.f32.mrb[0].mxu0
        %1096 = vdwg.mxu0
        %v1097 = vadd.f32 %v401, %v604
        %v1098 = vadd.f32 %v402, %v674
        %v1099 = vadd.f32 %v403, %v744
        %v1100 = vadd.f32 %v404, %v814
        %v1101 = vadd.f32 %v405, %v884
        %v1102 = vadd.f32 %v406, %v954
        %v1103 = vadd.f32 %v407, %v1024
        %v1104 = vadd.f32 %v408, %v1094
        %1105 = vst [vmem:[#allocation8] sm:$0x1] %v1097
        %1106 = vst [vmem:[#allocation8 + $0x1] sm:$0x1] %v1098
        %1107 = vst [vmem:[#allocation8 + $0x2] sm:$0x1] %v1099
        %1108 = vst [vmem:[#allocation8 + $0x3] sm:$0x1] %v1100
        %1109 = vst [vmem:[#allocation8 + $0x4] sm:$0x1] %v1101
        %1110 = vst [vmem:[#allocation8 + $0x5] sm:$0x1] %v1102
        %1111 = vst [vmem:[#allocation8 + $0x6] sm:$0x1] %v1103
        %1112 = vst [vmem:[#allocation8 + $0x7] sm:$0x1] %v1104
        %v1113 = vld [vmem:[#allocation9] sm:$0x1]
        %v1114 = vld [vmem:[#allocation9 + $0x1] sm:$0x1]
        %v1115 = vld [vmem:[#allocation9 + $0x2] sm:$0x1]
        %v1116 = vld [vmem:[#allocation9 + $0x3] sm:$0x1]
        %v1117 = vld [vmem:[#allocation9 + $0x4] sm:$0x1]
        %v1118 = vld [vmem:[#allocation9 + $0x5] sm:$0x1]
        %v1119 = vld [vmem:[#allocation9 + $0x6] sm:$0x1]
        %v1120 = vld [vmem:[#allocation9 + $0x7] sm:$0x1]
        %v1121 = vld [vmem:[%s336] sm:$0xff]
        %v1122 = vld [vmem:[%s336 + $0x8] sm:$0xff]
        %v1123 = vld [vmem:[%s336 + $0x10] sm:$0xff]
        %v1124 = vld [vmem:[%s336 + $0x18] sm:$0xff]
        %v1125 = vld [vmem:[%s336 + $0x20] sm:$0xff]
        %v1126 = vld [vmem:[%s336 + $0x28] sm:$0xff]
        %v1127 = vld [vmem:[%s336 + $0x30] sm:$0xff]
        %v1128 = vld [vmem:[%s336 + $0x38] sm:$0xff]
        %v1129 = vld [vmem:[%s336 + $0x40] sm:$0xff]
        %v1130 = vld [vmem:[%s336 + $0x48] sm:$0xff]
        %v1131 = vld [vmem:[%s336 + $0x50] sm:$0xff]
        %v1132 = vld [vmem:[%s336 + $0x58] sm:$0xff]
        %v1133 = vld [vmem:[%s336 + $0x60] sm:$0xff]
        %v1134 = vld [vmem:[%s336 + $0x68] sm:$0xff]
        %v1135 = vld [vmem:[%s336 + $0x70] sm:$0xff]
        %v1136 = vld [vmem:[%s336 + $0x78] sm:$0xff]
        %v1137 = vld [vmem:[%s336 + $0x80] sm:$0xff]
        %v1138 = vld [vmem:[%s336 + $0x88] sm:$0xff]
        %v1139 = vld [vmem:[%s336 + $0x90] sm:$0xff]
        %v1140 = vld [vmem:[%s336 + $0x98] sm:$0xff]
        %v1141 = vld [vmem:[%s336 + $0xa0] sm:$0xff]
        %v1142 = vld [vmem:[%s336 + $0xa8] sm:$0xff]
        %v1143 = vld [vmem:[%s336 + $0xb0] sm:$0xff]
        %v1144 = vld [vmem:[%s336 + $0xb8] sm:$0xff]
        %v1145 = vld [vmem:[%s336 + $0xc0] sm:$0xff]
        %v1146 = vld [vmem:[%s336 + $0xc8] sm:$0xff]
        %v1147 = vld [vmem:[%s336 + $0xd0] sm:$0xff]
        %v1148 = vld [vmem:[%s336 + $0xd8] sm:$0xff]
        %v1149 = vld [vmem:[%s336 + $0xe0] sm:$0xff]
        %v1150 = vld [vmem:[%s336 + $0xe8] sm:$0xff]
        %v1151 = vld [vmem:[%s336 + $0xf0] sm:$0xff]
        %v1152 = vld [vmem:[%s336 + $0xf8] sm:$0xff]
        %v1153 = vld [vmem:[%s336 + $0x100] sm:$0xff]
        %v1154 = vld [vmem:[%s336 + $0x108] sm:$0xff]
        %v1155 = vld [vmem:[%s336 + $0x110] sm:$0xff]
        %v1156 = vld [vmem:[%s336 + $0x118] sm:$0xff]
        %v1157 = vld [vmem:[%s336 + $0x120] sm:$0xff]
        %v1158 = vld [vmem:[%s336 + $0x128] sm:$0xff]
        %v1159 = vld [vmem:[%s336 + $0x130] sm:$0xff]
        %v1160 = vld [vmem:[%s336 + $0x138] sm:$0xff]
        %v1161 = vld [vmem:[%s336 + $0x140] sm:$0xff]
        %v1162 = vld [vmem:[%s336 + $0x148] sm:$0xff]
        %v1163 = vld [vmem:[%s336 + $0x150] sm:$0xff]
        %v1164 = vld [vmem:[%s336 + $0x158] sm:$0xff]
        %v1165 = vld [vmem:[%s336 + $0x160] sm:$0xff]
        %v1166 = vld [vmem:[%s336 + $0x168] sm:$0xff]
        %v1167 = vld [vmem:[%s336 + $0x170] sm:$0xff]
        %v1168 = vld [vmem:[%s336 + $0x178] sm:$0xff]
        %v1169 = vld [vmem:[%s336 + $0x180] sm:$0xff]
        %v1170 = vld [vmem:[%s336 + $0x188] sm:$0xff]
        %v1171 = vld [vmem:[%s336 + $0x190] sm:$0xff]
        %v1172 = vld [vmem:[%s336 + $0x198] sm:$0xff]
        %v1173 = vld [vmem:[%s336 + $0x1a0] sm:$0xff]
        %v1174 = vld [vmem:[%s336 + $0x1a8] sm:$0xff]
        %v1175 = vld [vmem:[%s336 + $0x1b0] sm:$0xff]
        %v1176 = vld [vmem:[%s336 + $0x1b8] sm:$0xff]
        %v1177 = vld [vmem:[%s336 + $0x1c0] sm:$0xff]
        %v1178 = vld [vmem:[%s336 + $0x1c8] sm:$0xff]
        %v1179 = vld [vmem:[%s336 + $0x1d0] sm:$0xff]
        %v1180 = vld [vmem:[%s336 + $0x1d8] sm:$0xff]
        %v1181 = vld [vmem:[%s336 + $0x1e0] sm:$0xff]
        %v1182 = vld [vmem:[%s336 + $0x1e8] sm:$0xff]
        %v1183 = vld [vmem:[%s336 + $0x1f0] sm:$0xff]
        %v1184 = vld [vmem:[%s336 + $0x1f8] sm:$0xff]
        %v1185 = vld [vmem:[%s336 + $0x200] sm:$0xff]
        %v1186 = vld [vmem:[%s336 + $0x208] sm:$0xff]
        %v1187 = vld [vmem:[%s336 + $0x210] sm:$0xff]
        %v1188 = vld [vmem:[%s336 + $0x218] sm:$0xff]
        %v1189 = vld [vmem:[%s336 + $0x220] sm:$0xff]
        %v1190 = vld [vmem:[%s336 + $0x228] sm:$0xff]
        %v1191 = vld [vmem:[%s336 + $0x230] sm:$0xff]
        %v1192 = vld [vmem:[%s336 + $0x238] sm:$0xff]
        %v1193 = vld [vmem:[%s336 + $0x240] sm:$0xff]
        %v1194 = vld [vmem:[%s336 + $0x248] sm:$0xff]
        %v1195 = vld [vmem:[%s336 + $0x250] sm:$0xff]
        %v1196 = vld [vmem:[%s336 + $0x258] sm:$0xff]
        %v1197 = vld [vmem:[%s336 + $0x260] sm:$0xff]
        %v1198 = vld [vmem:[%s336 + $0x268] sm:$0xff]
        %v1199 = vld [vmem:[%s336 + $0x270] sm:$0xff]
        %v1200 = vld [vmem:[%s336 + $0x278] sm:$0xff]
        %v1201 = vld [vmem:[%s336 + $0x280] sm:$0xff]
        %v1202 = vld [vmem:[%s336 + $0x288] sm:$0xff]
        %v1203 = vld [vmem:[%s336 + $0x290] sm:$0xff]
        %v1204 = vld [vmem:[%s336 + $0x298] sm:$0xff]
        %v1205 = vld [vmem:[%s336 + $0x2a0] sm:$0xff]
        %v1206 = vld [vmem:[%s336 + $0x2a8] sm:$0xff]
        %v1207 = vld [vmem:[%s336 + $0x2b0] sm:$0xff]
        %v1208 = vld [vmem:[%s336 + $0x2b8] sm:$0xff]
        %v1209 = vld [vmem:[%s336 + $0x2c0] sm:$0xff]
        %v1210 = vld [vmem:[%s336 + $0x2c8] sm:$0xff]
        %v1211 = vld [vmem:[%s336 + $0x2d0] sm:$0xff]
        %v1212 = vld [vmem:[%s336 + $0x2d8] sm:$0xff]
        %v1213 = vld [vmem:[%s336 + $0x2e0] sm:$0xff]
        %v1214 = vld [vmem:[%s336 + $0x2e8] sm:$0xff]
        %v1215 = vld [vmem:[%s336 + $0x2f0] sm:$0xff]
        %v1216 = vld [vmem:[%s336 + $0x2f8] sm:$0xff]
        %v1217 = vld [vmem:[%s336 + $0x300] sm:$0xff]
        %v1218 = vld [vmem:[%s336 + $0x308] sm:$0xff]
        %v1219 = vld [vmem:[%s336 + $0x310] sm:$0xff]
        %v1220 = vld [vmem:[%s336 + $0x318] sm:$0xff]
        %v1221 = vld [vmem:[%s336 + $0x320] sm:$0xff]
        %v1222 = vld [vmem:[%s336 + $0x328] sm:$0xff]
        %v1223 = vld [vmem:[%s336 + $0x330] sm:$0xff]
        %v1224 = vld [vmem:[%s336 + $0x338] sm:$0xff]
        %v1225 = vld [vmem:[%s336 + $0x340] sm:$0xff]
        %v1226 = vld [vmem:[%s336 + $0x348] sm:$0xff]
        %v1227 = vld [vmem:[%s336 + $0x350] sm:$0xff]
        %v1228 = vld [vmem:[%s336 + $0x358] sm:$0xff]
        %v1229 = vld [vmem:[%s336 + $0x360] sm:$0xff]
        %v1230 = vld [vmem:[%s336 + $0x368] sm:$0xff]
        %v1231 = vld [vmem:[%s336 + $0x370] sm:$0xff]
        %v1232 = vld [vmem:[%s336 + $0x378] sm:$0xff]
        %v1233 = vld [vmem:[%s336 + $0x380] sm:$0xff]
        %v1234 = vld [vmem:[%s336 + $0x388] sm:$0xff]
        %v1235 = vld [vmem:[%s336 + $0x390] sm:$0xff]
        %v1236 = vld [vmem:[%s336 + $0x398] sm:$0xff]
        %v1237 = vld [vmem:[%s336 + $0x3a0] sm:$0xff]
        %v1238 = vld [vmem:[%s336 + $0x3a8] sm:$0xff]
        %v1239 = vld [vmem:[%s336 + $0x3b0] sm:$0xff]
        %v1240 = vld [vmem:[%s336 + $0x3b8] sm:$0xff]
        %v1241 = vld [vmem:[%s336 + $0x3c0] sm:$0xff]
        %v1242 = vld [vmem:[%s336 + $0x3c8] sm:$0xff]
        %v1243 = vld [vmem:[%s336 + $0x3d0] sm:$0xff]
        %v1244 = vld [vmem:[%s336 + $0x3d8] sm:$0xff]
        %v1245 = vld [vmem:[%s336 + $0x3e0] sm:$0xff]
        %v1246 = vld [vmem:[%s336 + $0x3e8] sm:$0xff]
        %v1247 = vld [vmem:[%s336 + $0x3f0] sm:$0xff]
        %v1248 = vld [vmem:[%s336 + $0x3f8] sm:$0xff]
        %1249 = vmatprep.subr.mxu0 0.0
        %1250 = vmatpush1.msra.mxu0 %v1121
        %1251 = vmatprep.subr.mxu0 0.0
        %1252 = vmatpush1.msra.mxu0 %v1122
        %1253 = vmatprep.subr.mxu0 0.0
        %1254 = vmatpush1.msra.mxu0 %v1123
        %1255 = vmatprep.subr.mxu0 0.0
        %1256 = vmatpush1.msra.mxu0 %v1124
        %1257 = vmatprep.subr.mxu0 0.0
        %1258 = vmatpush1.msra.mxu0 %v1125
        %1259 = vmatprep.subr.mxu0 0.0
        %1260 = vmatpush1.msra.mxu0 %v1126
        %1261 = vmatprep.subr.mxu0 0.0
        %1262 = vmatpush1.msra.mxu0 %v1127
        %1263 = vmatprep.subr.mxu0 0.0
        %1264 = vmatpush1.msra.mxu0 %v1128
        %1265 = vmatprep.subr.mxu0 0.0
        %1266 = vmatpush1.msra.mxu0 %v1129
        %1267 = vmatprep.subr.mxu0 0.0
        %1268 = vmatpush1.msra.mxu0 %v1130
        %1269 = vmatprep.subr.mxu0 0.0
        %1270 = vmatpush1.msra.mxu0 %v1131
        %1271 = vmatprep.subr.mxu0 0.0
        %1272 = vmatpush1.msra.mxu0 %v1132
        %1273 = vmatprep.subr.mxu0 0.0
        %1274 = vmatpush1.msra.mxu0 %v1133
        %1275 = vmatprep.subr.mxu0 0.0
        %1276 = vmatpush1.msra.mxu0 %v1134
        %1277 = vmatprep.subr.mxu0 0.0
        %1278 = vmatpush1.msra.mxu0 %v1135
        %1279 = vmatprep.subr.mxu0 0.0
        %1280 = vmatpush1.msra.mxu0 %v1136
        %1281 = vmatprep.subr.mxu0 0.0
        %1282 = vmatpush1.msra.mxu0 0.0
        %1283 = vmatprep.subr.mxu0 0.0
        %1284 = vmatpush1.msra.mxu0 0.0
        %1285 = vmatprep.subr.mxu0 0.0
        %1286 = vmatpush1.msra.mxu0 0.0
        %1287 = vmatprep.subr.mxu0 0.0
        %1288 = vmatpush1.msra.mxu0 0.0
        %1289 = vmatprep.subr.mxu0 0.0
        %1290 = vmatpush1.msra.mxu0 0.0
        %1291 = vmatprep.subr.mxu0 0.0
        %1292 = vmatpush1.msra.mxu0 0.0
        %1293 = vmatprep.subr.mxu0 0.0
        %1294 = vmatpush1.msra.mxu0 0.0
        %1295 = vmatprep.subr.mxu0 0.0
        %1296 = vmatpush1.msra.mxu0 0.0
        %1297 = vmatprep.subr.mxu0 0.0
        %1298 = vmatpush1.msra.mxu0 0.0
        %1299 = vmatprep.subr.mxu0 0.0
        %1300 = vmatpush1.msra.mxu0 0.0
        %1301 = vmatprep.subr.mxu0 0.0
        %1302 = vmatpush1.msra.mxu0 0.0
        %1303 = vmatprep.subr.mxu0 0.0
        %1304 = vmatpush1.msra.mxu0 0.0
        %1305 = vmatprep.subr.mxu0 0.0
        %1306 = vmatpush1.msra.mxu0 0.0
        %1307 = vmatprep.subr.mxu0 0.0
        %1308 = vmatpush1.msra.mxu0 0.0
        %1309 = vmatprep.subr.mxu0 0.0
        %1310 = vmatpush1.msra.mxu0 0.0
        %1311 = vmatprep.subr.mxu0 0.0
        %1312 = vmatpush1.msra.mxu0 0.0
        %1313 = vmatprep.mubr.f32.mxu0 0.0
        %1314 = vmatmul.mubr.f32.gmra.mrb[0].mxu0 %v393
        %v1315 = vpop.f32.mrb[0].mxu0
        %v1316 = vadd.f32 0.0, %v1315
        %v1317 = vpop.f32.mrb[0].mxu0
        %1318 = vdwg.mxu0
        %1319 = vmatprep.subr.mxu0 0.0
        %1320 = vmatpush1.msra.mxu0 %v1137
        %1321 = vmatprep.subr.mxu0 0.0
        %1322 = vmatpush1.msra.mxu0 %v1138
        %1323 = vmatprep.subr.mxu0 0.0
        %1324 = vmatpush1.msra.mxu0 %v1139
        %1325 = vmatprep.subr.mxu0 0.0
        %1326 = vmatpush1.msra.mxu0 %v1140
        %1327 = vmatprep.subr.mxu0 0.0
        %1328 = vmatpush1.msra.mxu0 %v1141
        %1329 = vmatprep.subr.mxu0 0.0
        %1330 = vmatpush1.msra.mxu0 %v1142
        %1331 = vmatprep.subr.mxu0 0.0
        %1332 = vmatpush1.msra.mxu0 %v1143
        %1333 = vmatprep.subr.mxu0 0.0
        %1334 = vmatpush1.msra.mxu0 %v1144
        %1335 = vmatprep.subr.mxu0 0.0
        %1336 = vmatpush1.msra.mxu0 %v1145
        %1337 = vmatprep.subr.mxu0 0.0
        %1338 = vmatpush1.msra.mxu0 %v1146
        %1339 = vmatprep.subr.mxu0 0.0
        %1340 = vmatpush1.msra.mxu0 %v1147
        %1341 = vmatprep.subr.mxu0 0.0
        %1342 = vmatpush1.msra.mxu0 %v1148
        %1343 = vmatprep.subr.mxu0 0.0
        %1344 = vmatpush1.msra.mxu0 %v1149
        %1345 = vmatprep.subr.mxu0 0.0
        %1346 = vmatpush1.msra.mxu0 %v1150
        %1347 = vmatprep.subr.mxu0 0.0
        %1348 = vmatpush1.msra.mxu0 %v1151
        %1349 = vmatprep.subr.mxu0 0.0
        %1350 = vmatpush1.msra.mxu0 %v1152
        %1351 = vmatprep.subr.mxu0 0.0
        %1352 = vmatpush1.msra.mxu0 0.0
        %1353 = vmatprep.subr.mxu0 0.0
        %1354 = vmatpush1.msra.mxu0 0.0
        %1355 = vmatprep.subr.mxu0 0.0
        %1356 = vmatpush1.msra.mxu0 0.0
        %1357 = vmatprep.subr.mxu0 0.0
        %1358 = vmatpush1.msra.mxu0 0.0
        %1359 = vmatprep.subr.mxu0 0.0
        %1360 = vmatpush1.msra.mxu0 0.0
        %1361 = vmatprep.subr.mxu0 0.0
        %1362 = vmatpush1.msra.mxu0 0.0
        %1363 = vmatprep.subr.mxu0 0.0
        %1364 = vmatpush1.msra.mxu0 0.0
        %1365 = vmatprep.subr.mxu0 0.0
        %1366 = vmatpush1.msra.mxu0 0.0
        %1367 = vmatprep.subr.mxu0 0.0
        %1368 = vmatpush1.msra.mxu0 0.0
        %1369 = vmatprep.subr.mxu0 0.0
        %1370 = vmatpush1.msra.mxu0 0.0
        %1371 = vmatprep.subr.mxu0 0.0
        %1372 = vmatpush1.msra.mxu0 0.0
        %1373 = vmatprep.subr.mxu0 0.0
        %1374 = vmatpush1.msra.mxu0 0.0
        %1375 = vmatprep.subr.mxu0 0.0
        %1376 = vmatpush1.msra.mxu0 0.0
        %1377 = vmatprep.subr.mxu0 0.0
        %1378 = vmatpush1.msra.mxu0 0.0
        %1379 = vmatprep.subr.mxu0 0.0
        %1380 = vmatpush1.msra.mxu0 0.0
        %1381 = vmatprep.subr.mxu0 0.0
        %1382 = vmatpush1.msra.mxu0 0.0
        %1383 = vmatprep.mubr.f32.mxu0 0.0
        %1384 = vmatmul.mubr.f32.gmra.mrb[0].mxu0 %v394
        %v1385 = vpop.f32.mrb[0].mxu0
        %v1386 = vadd.f32 0.0, %v1385
        %v1387 = vpop.f32.mrb[0].mxu0
        %1388 = vdwg.mxu0
        %1389 = vmatprep.subr.mxu0 0.0
        %1390 = vmatpush1.msra.mxu0 %v1153
        %1391 = vmatprep.subr.mxu0 0.0
        %1392 = vmatpush1.msra.mxu0 %v1154
        %1393 = vmatprep.subr.mxu0 0.0
        %1394 = vmatpush1.msra.mxu0 %v1155
        %1395 = vmatprep.subr.mxu0 0.0
        %1396 = vmatpush1.msra.mxu0 %v1156
        %1397 = vmatprep.subr.mxu0 0.0
        %1398 = vmatpush1.msra.mxu0 %v1157
        %1399 = vmatprep.subr.mxu0 0.0
        %1400 = vmatpush1.msra.mxu0 %v1158
        %1401 = vmatprep.subr.mxu0 0.0
        %1402 = vmatpush1.msra.mxu0 %v1159
        %1403 = vmatprep.subr.mxu0 0.0
        %1404 = vmatpush1.msra.mxu0 %v1160
        %1405 = vmatprep.subr.mxu0 0.0
        %1406 = vmatpush1.msra.mxu0 %v1161
        %1407 = vmatprep.subr.mxu0 0.0
        %1408 = vmatpush1.msra.mxu0 %v1162
        %1409 = vmatprep.subr.mxu0 0.0
        %1410 = vmatpush1.msra.mxu0 %v1163
        %1411 = vmatprep.subr.mxu0 0.0
        %1412 = vmatpush1.msra.mxu0 %v1164
        %1413 = vmatprep.subr.mxu0 0.0
        %1414 = vmatpush1.msra.mxu0 %v1165
        %1415 = vmatprep.subr.mxu0 0.0
        %1416 = vmatpush1.msra.mxu0 %v1166
        %1417 = vmatprep.subr.mxu0 0.0
        %1418 = vmatpush1.msra.mxu0 %v1167
        %1419 = vmatprep.subr.mxu0 0.0
        %1420 = vmatpush1.msra.mxu0 %v1168
        %1421 = vmatprep.subr.mxu0 0.0
        %1422 = vmatpush1.msra.mxu0 0.0
        %1423 = vmatprep.subr.mxu0 0.0
        %1424 = vmatpush1.msra.mxu0 0.0
        %1425 = vmatprep.subr.mxu0 0.0
        %1426 = vmatpush1.msra.mxu0 0.0
        %1427 = vmatprep.subr.mxu0 0.0
        %1428 = vmatpush1.msra.mxu0 0.0
        %1429 = vmatprep.subr.mxu0 0.0
        %1430 = vmatpush1.msra.mxu0 0.0
        %1431 = vmatprep.subr.mxu0 0.0
        %1432 = vmatpush1.msra.mxu0 0.0
        %1433 = vmatprep.subr.mxu0 0.0
        %1434 = vmatpush1.msra.mxu0 0.0
        %1435 = vmatprep.subr.mxu0 0.0
        %1436 = vmatpush1.msra.mxu0 0.0
        %1437 = vmatprep.subr.mxu0 0.0
        %1438 = vmatpush1.msra.mxu0 0.0
        %1439 = vmatprep.subr.mxu0 0.0
        %1440 = vmatpush1.msra.mxu0 0.0
        %1441 = vmatprep.subr.mxu0 0.0
        %1442 = vmatpush1.msra.mxu0 0.0
        %1443 = vmatprep.subr.mxu0 0.0
        %1444 = vmatpush1.msra.mxu0 0.0
        %1445 = vmatprep.subr.mxu0 0.0
        %1446 = vmatpush1.msra.mxu0 0.0
        %1447 = vmatprep.subr.mxu0 0.0
        %1448 = vmatpush1.msra.mxu0 0.0
        %1449 = vmatprep.subr.mxu0 0.0
        %1450 = vmatpush1.msra.mxu0 0.0
        %1451 = vmatprep.subr.mxu0 0.0
        %1452 = vmatpush1.msra.mxu0 0.0
        %1453 = vmatprep.mubr.f32.mxu0 0.0
        %1454 = vmatmul.mubr.f32.gmra.mrb[0].mxu0 %v395
        %v1455 = vpop.f32.mrb[0].mxu0
        %v1456 = vadd.f32 0.0, %v1455
        %v1457 = vpop.f32.mrb[0].mxu0
        %1458 = vdwg.mxu0
        %1459 = vmatprep.subr.mxu0 0.0
        %1460 = vmatpush1.msra.mxu0 %v1169
        %1461 = vmatprep.subr.mxu0 0.0
        %1462 = vmatpush1.msra.mxu0 %v1170
        %1463 = vmatprep.subr.mxu0 0.0
        %1464 = vmatpush1.msra.mxu0 %v1171
        %1465 = vmatprep.subr.mxu0 0.0
        %1466 = vmatpush1.msra.mxu0 %v1172
        %1467 = vmatprep.subr.mxu0 0.0
        %1468 = vmatpush1.msra.mxu0 %v1173
        %1469 = vmatprep.subr.mxu0 0.0
        %1470 = vmatpush1.msra.mxu0 %v1174
        %1471 = vmatprep.subr.mxu0 0.0
        %1472 = vmatpush1.msra.mxu0 %v1175
        %1473 = vmatprep.subr.mxu0 0.0
        %1474 = vmatpush1.msra.mxu0 %v1176
        %1475 = vmatprep.subr.mxu0 0.0
        %1476 = vmatpush1.msra.mxu0 %v1177
        %1477 = vmatprep.subr.mxu0 0.0
        %1478 = vmatpush1.msra.mxu0 %v1178
        %1479 = vmatprep.subr.mxu0 0.0
        %1480 = vmatpush1.msra.mxu0 %v1179
        %1481 = vmatprep.subr.mxu0 0.0
        %1482 = vmatpush1.msra.mxu0 %v1180
        %1483 = vmatprep.subr.mxu0 0.0
        %1484 = vmatpush1.msra.mxu0 %v1181
        %1485 = vmatprep.subr.mxu0 0.0
        %1486 = vmatpush1.msra.mxu0 %v1182
        %1487 = vmatprep.subr.mxu0 0.0
        %1488 = vmatpush1.msra.mxu0 %v1183
        %1489 = vmatprep.subr.mxu0 0.0
        %1490 = vmatpush1.msra.mxu0 %v1184
        %1491 = vmatprep.subr.mxu0 0.0
        %1492 = vmatpush1.msra.mxu0 0.0
        %1493 = vmatprep.subr.mxu0 0.0
        %1494 = vmatpush1.msra.mxu0 0.0
        %1495 = vmatprep.subr.mxu0 0.0
        %1496 = vmatpush1.msra.mxu0 0.0
        %1497 = vmatprep.subr.mxu0 0.0
        %1498 = vmatpush1.msra.mxu0 0.0
        %1499 = vmatprep.subr.mxu0 0.0
        %1500 = vmatpush1.msra.mxu0 0.0
        %1501 = vmatprep.subr.mxu0 0.0
        %1502 = vmatpush1.msra.mxu0 0.0
        %1503 = vmatprep.subr.mxu0 0.0
        %1504 = vmatpush1.msra.mxu0 0.0
        %1505 = vmatprep.subr.mxu0 0.0
        %1506 = vmatpush1.msra.mxu0 0.0
        %1507 = vmatprep.subr.mxu0 0.0
        %1508 = vmatpush1.msra.mxu0 0.0
        %1509 = vmatprep.subr.mxu0 0.0
        %1510 = vmatpush1.msra.mxu0 0.0
        %1511 = vmatprep.subr.mxu0 0.0
        %1512 = vmatpush1.msra.mxu0 0.0
        %1513 = vmatprep.subr.mxu0 0.0
        %1514 = vmatpush1.msra.mxu0 0.0
        %1515 = vmatprep.subr.mxu0 0.0
        %1516 = vmatpush1.msra.mxu0 0.0
        %1517 = vmatprep.subr.mxu0 0.0
        %1518 = vmatpush1.msra.mxu0 0.0
        %1519 = vmatprep.subr.mxu0 0.0
        %1520 = vmatpush1.msra.mxu0 0.0
        %1521 = vmatprep.subr.mxu0 0.0
        %1522 = vmatpush1.msra.mxu0 0.0
        %1523 = vmatprep.mubr.f32.mxu0 0.0
        %1524 = vmatmul.mubr.f32.gmra.mrb[0].mxu0 %v396
        %v1525 = vpop.f32.mrb[0].mxu0
        %v1526 = vadd.f32 0.0, %v1525
        %v1527 = vpop.f32.mrb[0].mxu0
        %1528 = vdwg.mxu0
        %1529 = vmatprep.subr.mxu0 0.0
        %1530 = vmatpush1.msra.mxu0 %v1185
        %1531 = vmatprep.subr.mxu0 0.0
        %1532 = vmatpush1.msra.mxu0 %v1186
        %1533 = vmatprep.subr.mxu0 0.0
        %1534 = vmatpush1.msra.mxu0 %v1187
        %1535 = vmatprep.subr.mxu0 0.0
        %1536 = vmatpush1.msra.mxu0 %v1188
        %1537 = vmatprep.subr.mxu0 0.0
        %1538 = vmatpush1.msra.mxu0 %v1189
        %1539 = vmatprep.subr.mxu0 0.0
        %1540 = vmatpush1.msra.mxu0 %v1190
        %1541 = vmatprep.subr.mxu0 0.0
        %1542 = vmatpush1.msra.mxu0 %v1191
        %1543 = vmatprep.subr.mxu0 0.0
        %1544 = vmatpush1.msra.mxu0 %v1192
        %1545 = vmatprep.subr.mxu0 0.0
        %1546 = vmatpush1.msra.mxu0 %v1193
        %1547 = vmatprep.subr.mxu0 0.0
        %1548 = vmatpush1.msra.mxu0 %v1194
        %1549 = vmatprep.subr.mxu0 0.0
        %1550 = vmatpush1.msra.mxu0 %v1195
        %1551 = vmatprep.subr.mxu0 0.0
        %1552 = vmatpush1.msra.mxu0 %v1196
        %1553 = vmatprep.subr.mxu0 0.0
        %1554 = vmatpush1.msra.mxu0 %v1197
        %1555 = vmatprep.subr.mxu0 0.0
        %1556 = vmatpush1.msra.mxu0 %v1198
        %1557 = vmatprep.subr.mxu0 0.0
        %1558 = vmatpush1.msra.mxu0 %v1199
        %1559 = vmatprep.subr.mxu0 0.0
        %1560 = vmatpush1.msra.mxu0 %v1200
        %1561 = vmatprep.subr.mxu0 0.0
        %1562 = vmatpush1.msra.mxu0 0.0
        %1563 = vmatprep.subr.mxu0 0.0
        %1564 = vmatpush1.msra.mxu0 0.0
        %1565 = vmatprep.subr.mxu0 0.0
        %1566 = vmatpush1.msra.mxu0 0.0
        %1567 = vmatprep.subr.mxu0 0.0
        %1568 = vmatpush1.msra.mxu0 0.0
        %1569 = vmatprep.subr.mxu0 0.0
        %1570 = vmatpush1.msra.mxu0 0.0
        %1571 = vmatprep.subr.mxu0 0.0
        %1572 = vmatpush1.msra.mxu0 0.0
        %1573 = vmatprep.subr.mxu0 0.0
        %1574 = vmatpush1.msra.mxu0 0.0
        %1575 = vmatprep.subr.mxu0 0.0
        %1576 = vmatpush1.msra.mxu0 0.0
        %1577 = vmatprep.subr.mxu0 0.0
        %1578 = vmatpush1.msra.mxu0 0.0
        %1579 = vmatprep.subr.mxu0 0.0
        %1580 = vmatpush1.msra.mxu0 0.0
        %1581 = vmatprep.subr.mxu0 0.0
        %1582 = vmatpush1.msra.mxu0 0.0
        %1583 = vmatprep.subr.mxu0 0.0
        %1584 = vmatpush1.msra.mxu0 0.0
        %1585 = vmatprep.subr.mxu0 0.0
        %1586 = vmatpush1.msra.mxu0 0.0
        %1587 = vmatprep.subr.mxu0 0.0
        %1588 = vmatpush1.msra.mxu0 0.0
        %1589 = vmatprep.subr.mxu0 0.0
        %1590 = vmatpush1.msra.mxu0 0.0
        %1591 = vmatprep.subr.mxu0 0.0
        %1592 = vmatpush1.msra.mxu0 0.0
        %1593 = vmatprep.mubr.f32.mxu0 0.0
        %1594 = vmatmul.mubr.f32.gmra.mrb[0].mxu0 %v397
        %v1595 = vpop.f32.mrb[0].mxu0
        %v1596 = vadd.f32 0.0, %v1595
        %v1597 = vpop.f32.mrb[0].mxu0
        %1598 = vdwg.mxu0
        %1599 = vmatprep.subr.mxu0 0.0
        %1600 = vmatpush1.msra.mxu0 %v1201
        %1601 = vmatprep.subr.mxu0 0.0
        %1602 = vmatpush1.msra.mxu0 %v1202
        %1603 = vmatprep.subr.mxu0 0.0
        %1604 = vmatpush1.msra.mxu0 %v1203
        %1605 = vmatprep.subr.mxu0 0.0
        %1606 = vmatpush1.msra.mxu0 %v1204
        %1607 = vmatprep.subr.mxu0 0.0
        %1608 = vmatpush1.msra.mxu0 %v1205
        %1609 = vmatprep.subr.mxu0 0.0
        %1610 = vmatpush1.msra.mxu0 %v1206
        %1611 = vmatprep.subr.mxu0 0.0
        %1612 = vmatpush1.msra.mxu0 %v1207
        %1613 = vmatprep.subr.mxu0 0.0
        %1614 = vmatpush1.msra.mxu0 %v1208
        %1615 = vmatprep.subr.mxu0 0.0
        %1616 = vmatpush1.msra.mxu0 %v1209
        %1617 = vmatprep.subr.mxu0 0.0
        %1618 = vmatpush1.msra.mxu0 %v1210
        %1619 = vmatprep.subr.mxu0 0.0
        %1620 = vmatpush1.msra.mxu0 %v1211
        %1621 = vmatprep.subr.mxu0 0.0
        %1622 = vmatpush1.msra.mxu0 %v1212
        %1623 = vmatprep.subr.mxu0 0.0
        %1624 = vmatpush1.msra.mxu0 %v1213
        %1625 = vmatprep.subr.mxu0 0.0
        %1626 = vmatpush1.msra.mxu0 %v1214
        %1627 = vmatprep.subr.mxu0 0.0
        %1628 = vmatpush1.msra.mxu0 %v1215
        %1629 = vmatprep.subr.mxu0 0.0
        %1630 = vmatpush1.msra.mxu0 %v1216
        %1631 = vmatprep.subr.mxu0 0.0
        %1632 = vmatpush1.msra.mxu0 0.0
        %1633 = vmatprep.subr.mxu0 0.0
        %1634 = vmatpush1.msra.mxu0 0.0
        %1635 = vmatprep.subr.mxu0 0.0
        %1636 = vmatpush1.msra.mxu0 0.0
        %1637 = vmatprep.subr.mxu0 0.0
        %1638 = vmatpush1.msra.mxu0 0.0
        %1639 = vmatprep.subr.mxu0 0.0
        %1640 = vmatpush1.msra.mxu0 0.0
        %1641 = vmatprep.subr.mxu0 0.0
        %1642 = vmatpush1.msra.mxu0 0.0
        %1643 = vmatprep.subr.mxu0 0.0
        %1644 = vmatpush1.msra.mxu0 0.0
        %1645 = vmatprep.subr.mxu0 0.0
        %1646 = vmatpush1.msra.mxu0 0.0
        %1647 = vmatprep.subr.mxu0 0.0
        %1648 = vmatpush1.msra.mxu0 0.0
        %1649 = vmatprep.subr.mxu0 0.0
        %1650 = vmatpush1.msra.mxu0 0.0
        %1651 = vmatprep.subr.mxu0 0.0
        %1652 = vmatpush1.msra.mxu0 0.0
        %1653 = vmatprep.subr.mxu0 0.0
        %1654 = vmatpush1.msra.mxu0 0.0
        %1655 = vmatprep.subr.mxu0 0.0
        %1656 = vmatpush1.msra.mxu0 0.0
        %1657 = vmatprep.subr.mxu0 0.0
        %1658 = vmatpush1.msra.mxu0 0.0
        %1659 = vmatprep.subr.mxu0 0.0
        %1660 = vmatpush1.msra.mxu0 0.0
        %1661 = vmatprep.subr.mxu0 0.0
        %1662 = vmatpush1.msra.mxu0 0.0
        %1663 = vmatprep.mubr.f32.mxu0 0.0
        %1664 = vmatmul.mubr.f32.gmra.mrb[0].mxu0 %v398
        %v1665 = vpop.f32.mrb[0].mxu0
        %v1666 = vadd.f32 0.0, %v1665
        %v1667 = vpop.f32.mrb[0].mxu0
        %1668 = vdwg.mxu0
        %1669 = vmatprep.subr.mxu0 0.0
        %1670 = vmatpush1.msra.mxu0 %v1217
        %1671 = vmatprep.subr.mxu0 0.0
        %1672 = vmatpush1.msra.mxu0 %v1218
        %1673 = vmatprep.subr.mxu0 0.0
        %1674 = vmatpush1.msra.mxu0 %v1219
        %1675 = vmatprep.subr.mxu0 0.0
        %1676 = vmatpush1.msra.mxu0 %v1220
        %1677 = vmatprep.subr.mxu0 0.0
        %1678 = vmatpush1.msra.mxu0 %v1221
        %1679 = vmatprep.subr.mxu0 0.0
        %1680 = vmatpush1.msra.mxu0 %v1222
        %1681 = vmatprep.subr.mxu0 0.0
        %1682 = vmatpush1.msra.mxu0 %v1223
        %1683 = vmatprep.subr.mxu0 0.0
        %1684 = vmatpush1.msra.mxu0 %v1224
        %1685 = vmatprep.subr.mxu0 0.0
        %1686 = vmatpush1.msra.mxu0 %v1225
        %1687 = vmatprep.subr.mxu0 0.0
        %1688 = vmatpush1.msra.mxu0 %v1226
        %1689 = vmatprep.subr.mxu0 0.0
        %1690 = vmatpush1.msra.mxu0 %v1227
        %1691 = vmatprep.subr.mxu0 0.0
        %1692 = vmatpush1.msra.mxu0 %v1228
        %1693 = vmatprep.subr.mxu0 0.0
        %1694 = vmatpush1.msra.mxu0 %v1229
        %1695 = vmatprep.subr.mxu0 0.0
        %1696 = vmatpush1.msra.mxu0 %v1230
        %1697 = vmatprep.subr.mxu0 0.0
        %1698 = vmatpush1.msra.mxu0 %v1231
        %1699 = vmatprep.subr.mxu0 0.0
        %1700 = vmatpush1.msra.mxu0 %v1232
        %1701 = vmatprep.subr.mxu0 0.0
        %1702 = vmatpush1.msra.mxu0 0.0
        %1703 = vmatprep.subr.mxu0 0.0
        %1704 = vmatpush1.msra.mxu0 0.0
        %1705 = vmatprep.subr.mxu0 0.0
        %1706 = vmatpush1.msra.mxu0 0.0
        %1707 = vmatprep.subr.mxu0 0.0
        %1708 = vmatpush1.msra.mxu0 0.0
        %1709 = vmatprep.subr.mxu0 0.0
        %1710 = vmatpush1.msra.mxu0 0.0
        %1711 = vmatprep.subr.mxu0 0.0
        %1712 = vmatpush1.msra.mxu0 0.0
        %1713 = vmatprep.subr.mxu0 0.0
        %1714 = vmatpush1.msra.mxu0 0.0
        %1715 = vmatprep.subr.mxu0 0.0
        %1716 = vmatpush1.msra.mxu0 0.0
        %1717 = vmatprep.subr.mxu0 0.0
        %1718 = vmatpush1.msra.mxu0 0.0
        %1719 = vmatprep.subr.mxu0 0.0
        %1720 = vmatpush1.msra.mxu0 0.0
        %1721 = vmatprep.subr.mxu0 0.0
        %1722 = vmatpush1.msra.mxu0 0.0
        %1723 = vmatprep.subr.mxu0 0.0
        %1724 = vmatpush1.msra.mxu0 0.0
        %1725 = vmatprep.subr.mxu0 0.0
        %1726 = vmatpush1.msra.mxu0 0.0
        %1727 = vmatprep.subr.mxu0 0.0
        %1728 = vmatpush1.msra.mxu0 0.0
        %1729 = vmatprep.subr.mxu0 0.0
        %1730 = vmatpush1.msra.mxu0 0.0
        %1731 = vmatprep.subr.mxu0 0.0
        %1732 = vmatpush1.msra.mxu0 0.0
        %1733 = vmatprep.mubr.f32.mxu0 0.0
        %1734 = vmatmul.mubr.f32.gmra.mrb[0].mxu0 %v399
        %v1735 = vpop.f32.mrb[0].mxu0
        %v1736 = vadd.f32 0.0, %v1735
        %v1737 = vpop.f32.mrb[0].mxu0
        %1738 = vdwg.mxu0
        %1739 = vmatprep.subr.mxu0 0.0
        %1740 = vmatpush1.msra.mxu0 %v1233
        %1741 = vmatprep.subr.mxu0 0.0
        %1742 = vmatpush1.msra.mxu0 %v1234
        %1743 = vmatprep.subr.mxu0 0.0
        %1744 = vmatpush1.msra.mxu0 %v1235
        %1745 = vmatprep.subr.mxu0 0.0
        %1746 = vmatpush1.msra.mxu0 %v1236
        %1747 = vmatprep.subr.mxu0 0.0
        %1748 = vmatpush1.msra.mxu0 %v1237
        %1749 = vmatprep.subr.mxu0 0.0
        %1750 = vmatpush1.msra.mxu0 %v1238
        %1751 = vmatprep.subr.mxu0 0.0
        %1752 = vmatpush1.msra.mxu0 %v1239
        %1753 = vmatprep.subr.mxu0 0.0
        %1754 = vmatpush1.msra.mxu0 %v1240
        %1755 = vmatprep.subr.mxu0 0.0
        %1756 = vmatpush1.msra.mxu0 %v1241
        %1757 = vmatprep.subr.mxu0 0.0
        %1758 = vmatpush1.msra.mxu0 %v1242
        %1759 = vmatprep.subr.mxu0 0.0
        %1760 = vmatpush1.msra.mxu0 %v1243
        %1761 = vmatprep.subr.mxu0 0.0
        %1762 = vmatpush1.msra.mxu0 %v1244
        %1763 = vmatprep.subr.mxu0 0.0
        %1764 = vmatpush1.msra.mxu0 %v1245
        %1765 = vmatprep.subr.mxu0 0.0
        %1766 = vmatpush1.msra.mxu0 %v1246
        %1767 = vmatprep.subr.mxu0 0.0
        %1768 = vmatpush1.msra.mxu0 %v1247
        %1769 = vmatprep.subr.mxu0 0.0
        %1770 = vmatpush1.msra.mxu0 %v1248
        %1771 = vmatprep.subr.mxu0 0.0
        %1772 = vmatpush1.msra.mxu0 0.0
        %1773 = vmatprep.subr.mxu0 0.0
        %1774 = vmatpush1.msra.mxu0 0.0
        %1775 = vmatprep.subr.mxu0 0.0
        %1776 = vmatpush1.msra.mxu0 0.0
        %1777 = vmatprep.subr.mxu0 0.0
        %1778 = vmatpush1.msra.mxu0 0.0
        %1779 = vmatprep.subr.mxu0 0.0
        %1780 = vmatpush1.msra.mxu0 0.0
        %1781 = vmatprep.subr.mxu0 0.0
        %1782 = vmatpush1.msra.mxu0 0.0
        %1783 = vmatprep.subr.mxu0 0.0
        %1784 = vmatpush1.msra.mxu0 0.0
        %1785 = vmatprep.subr.mxu0 0.0
        %1786 = vmatpush1.msra.mxu0 0.0
        %1787 = vmatprep.subr.mxu0 0.0
        %1788 = vmatpush1.msra.mxu0 0.0
        %1789 = vmatprep.subr.mxu0 0.0
        %1790 = vmatpush1.msra.mxu0 0.0
        %1791 = vmatprep.subr.mxu0 0.0
        %1792 = vmatpush1.msra.mxu0 0.0
        %1793 = vmatprep.subr.mxu0 0.0
        %1794 = vmatpush1.msra.mxu0 0.0
        %1795 = vmatprep.subr.mxu0 0.0
        %1796 = vmatpush1.msra.mxu0 0.0
        %1797 = vmatprep.subr.mxu0 0.0
        %1798 = vmatpush1.msra.mxu0 0.0
        %1799 = vmatprep.subr.mxu0 0.0
        %1800 = vmatpush1.msra.mxu0 0.0
        %1801 = vmatprep.subr.mxu0 0.0
        %1802 = vmatpush1.msra.mxu0 0.0
        %1803 = vmatprep.mubr.f32.mxu0 0.0
        %1804 = vmatmul.mubr.f32.gmra.mrb[0].mxu0 %v400
        %v1805 = vpop.f32.mrb[0].mxu0
        %v1806 = vadd.f32 0.0, %v1805
        %v1807 = vpop.f32.mrb[0].mxu0
        %1808 = vdwg.mxu0
        %v1809 = vadd.f32 %v1113, %v1316
        %v1810 = vadd.f32 %v1114, %v1386
        %v1811 = vadd.f32 %v1115, %v1456
        %v1812 = vadd.f32 %v1116, %v1526
        %v1813 = vadd.f32 %v1117, %v1596
        %v1814 = vadd.f32 %v1118, %v1666
        %v1815 = vadd.f32 %v1119, %v1736
        %v1816 = vadd.f32 %v1120, %v1806
        %1817 = vst [vmem:[#allocation9] sm:$0x1] %v1809
        %1818 = vst [vmem:[#allocation9 + $0x1] sm:$0x1] %v1810
        %1819 = vst [vmem:[#allocation9 + $0x2] sm:$0x1] %v1811
        %1820 = vst [vmem:[#allocation9 + $0x3] sm:$0x1] %v1812
        %1821 = vst [vmem:[#allocation9 + $0x4] sm:$0x1] %v1813
        %1822 = vst [vmem:[#allocation9 + $0x5] sm:$0x1] %v1814
        %1823 = vst [vmem:[#allocation9 + $0x6] sm:$0x1] %v1815
        %1824 = vst [vmem:[#allocation9 + $0x7] sm:$0x1] %v1816
        // Predicated region
        $region49: #{tpu_custom_call.1} parent=31 // pred_check
          %p1825 = pneg %p138
        $region50: #{tpu_custom_call.1} parent=31 // pred_check_branch
          %1827 = sbr.rel (%p1825) target = $region52
        $region51: #{tpu_custom_call.1} parent=31 // pred_region
          %s1828 = smul.u32 8, %s28
          %s1830 = ssub.s32 128, 128
          %1831 = vsyncadd [#allocation4], %s1830
          %s1832 = smul.addr %s1828, 16
          %s1833 = scalar_lea.hbm %s3, %s1832
          %s1834 = sshll.u32 [#allocation8], 4
          %s1835 = int_to_ptr.vmem [resolvable:$true] %s1834
          %1840 = dma.vmem_to_hbm [thread:$0]  %s1835, 128, %s1833, [#allocation4], 16, 16, 1
        $region52: #{tpu_custom_call.1} parent=31 // pred_fallthru
          _
        // Predicated region
        $region53: #{tpu_custom_call.1} parent=31 // pred_check
          %p1841 = pneg %p164
        $region54: #{tpu_custom_call.1} parent=31 // pred_check_branch
          %1843 = sbr.rel (%p1841) target = $region56
        $region55: #{tpu_custom_call.1} parent=31 // pred_region
          %s1844 = smul.u32 8, %s28
          %s1846 = ssub.s32 128, 128
          %1847 = vsyncadd [#allocation10], %s1846
          %s1848 = smul.addr %s1844, 16
          %s1849 = scalar_lea.hbm %s4, %s1848
          %s1850 = sshll.u32 [#allocation9], 4
          %s1851 = int_to_ptr.vmem [resolvable:$true] %s1850
          %1856 = dma.vmem_to_hbm [thread:$0]  %s1851, 128, %s1849, [#allocation10], 16, 16, 1
        $region56: #{tpu_custom_call.1} parent=31 // pred_fallthru
          _
        // Predicated region
        $region57: #{tpu_custom_call.1} parent=31 // pred_check
          %p1857 = pneg %p138
        $region58: #{tpu_custom_call.1} parent=31 // pred_check_branch
          %1859 = sbr.rel (%p1857) target = $region60
        $region59: #{tpu_custom_call.1} parent=31 // pred_region
          %1860 = dma.done [#allocation4], 128
        $region60: #{tpu_custom_call.1} parent=31 // pred_fallthru
          _
        // Predicated region
        $region61: #{tpu_custom_call.1} parent=31 // pred_check
          %p1861 = pneg %p164
        $region62: #{tpu_custom_call.1} parent=31 // pred_check_branch
          %1863 = sbr.rel (%p1861) target = $region64
        $region63: #{tpu_custom_call.1} parent=31 // pred_region
          %1864 = dma.done [#allocation10], 128
        $region64: #{tpu_custom_call.1} parent=31 // pred_fallthru
          _
      $region32: #{tpu_custom_call.1} parent=5 // pred_fallthru
        _
      %p1865 = scmp.le.s32.totalorder 2, %s19
      // Predicated region
      $region65: #{tpu_custom_call.1} parent=5 // pred_check
        %p1866 = pneg %p1865
      $region66: #{tpu_custom_call.1} parent=5 // pred_check_branch
        %1868 = sbr.rel (%p1866) target = $region68
      $region67: #{tpu_custom_call.1} parent=5 // pred_region
        %s1869 = ssub.s32 %s19, 2
      $region68: #{tpu_custom_call.1} parent=5 // pred_fallthru
        _
    $region6: #{tpu_custom_call.1} parent=1 // loop_footer
      %s23 = sadd.s32 1, %s19
    $region7: #{tpu_custom_call.1} parent=1 // loop_footer_branch
      %18 = sbr.rel target = $region3
    $region8: #{tpu_custom_call.1} parent=1 // loop_exit
      _
    %1870 = vsyncpa [#allocation3], 1
    %s1871 = scalar_lea.sflag [#allocation3], 1
    %1872 = vsyncpa %s1871, 1
    %1873 = vsyncpa [#allocation6], 1
    %s1874 = scalar_lea.sflag [#allocation6], 1
    %1875 = vsyncpa %s1874, 1
    %1876 = vsyncpa [#allocation4], 1
    %s1877 = scalar_lea.sflag [#allocation4], 1
    %1878 = vsyncpa %s1877, 1
    %1879 = vsyncpa [#allocation10], 1

</llo_original>
